<compile_context>
chip_gen: v5e
topology: v5e:2x2
jax: 0.10.0
libtpu: 0.0.40
codegen_flags: <defaults>
</compile_context>

<pallas_src>
import jax
import jax.numpy as jnp
from jax import lax
from jax.experimental import pallas as pl
from jax.experimental.pallas import tpu as pltpu


def _round_up(n, m):
    return ((n + m - 1) // m) * m


def _pad_gate_cols(w, H, Hp):
    """(K, 3H) -> (K, 3Hp): zero-pad each gate slab from H to Hp columns."""
    parts = [jnp.pad(w[:, g * H:(g + 1) * H], ((0, 0), (0, Hp - H))) for g in range(3)]
    return jnp.concatenate(parts, axis=1)


def gru_kernel(x_ref, w_ih_ref, b_comb_ref, w_hh_ref, b_hn_ref, w_fc_ref, b_fc_ref,
               out_ref, gx_ref):
    """Fused input projection + GRU recurrence + FC head (single invocation).

    x_ref:      (T*Bp, Dp)   time-major, batch-padded, contraction-padded input
    w_ih_ref:   (Dp, 3*Hp)   input->gates weights (gate slabs 128-lane aligned)
    b_comb_ref: (1, 3*Hp)    b_ih (+ b_hh folded in for r/z gates)
    w_hh_ref:   (Hp, 3*Hp)   hidden->gates weights
    b_hn_ref:   (1, Hp)      hidden bias of the n gate (scaled by r -> stays in loop)
    w_fc_ref:   (Hp, Op)     FC head weights (zero-padded)
    b_fc_ref:   (1, Op)
    out_ref:    (Bp, Op)
    gx_ref:     (T*Bp, 3*Hp) VMEM scratch holding the hoisted input projection
    """
    TB = x_ref.shape[0]
    Hp = w_hh_ref.shape[0]
    Bp = out_ref.shape[0]
    T = TB // Bp

    # ---- hoisted input projection: ONE MXU matmul for all timesteps ----------
    gx_ref[...] = (jnp.dot(x_ref[...], w_ih_ref[...],
                           preferred_element_type=jnp.float32) + b_comb_ref[...])

    # Loop-invariant values loaded / broadcast once (outside the unrolled body).
    w_hh = w_hh_ref[...]
    b_hn_b = jnp.broadcast_to(b_hn_ref[...], (Bp, Hp))

    def step(t, h):
        row = pl.multiple_of(t * Bp, Bp)
        gx_t = gx_ref[pl.ds(row, Bp), :]            # (Bp, 3Hp), sublane-aligned slice
        gh = jnp.dot(h, w_hh, preferred_element_type=jnp.float32)
        # r first: only r gates the serial chain into tanh(n).
        r = jax.nn.sigmoid(gx_t[:, 0:Hp] + gh[:, 0:Hp])
        n_pre = gx_t[:, 2 * Hp:] + r * (gh[:, 2 * Hp:] + b_hn_b)
        z = jax.nn.sigmoid(gx_t[:, Hp:2 * Hp] + gh[:, Hp:2 * Hp])
        n = jnp.tanh(n_pre)
        return (1.0 - z) * n + z * h

    h0 = jnp.zeros((Bp, Hp), jnp.float32)
    h = lax.fori_loop(0, T, step, h0, unroll=True)  # h carried in vregs

    out_ref[...] = (jnp.dot(h, w_fc_ref[...], preferred_element_type=jnp.float32)
                    + b_fc_ref[...]).astype(out_ref.dtype)


@jax.jit
def gru_forward(x, params):
    """x: (B, T, D) float32 -> (B, O) float32.

    Matches torch.nn.GRU(input_dim, hidden_dim, batch_first=True) (single layer,
    as built by the PyTorch module) followed by nn.Linear on the last timestep.
    """
    w_ih, w_hh, b_ih, b_hh, w_fc, b_fc = params
    D = w_ih.shape[0]
    if x.ndim != 3:
        # Mirrors the PyTorch module's reshape(x.shape[0], -1, input_dim).
        x = x.reshape(x.shape[0], -1, D)
    B, T, _ = x.shape
    H = w_hh.shape[0]
    O = w_fc.shape[1]
    Hp = _round_up(H, 128)              # one full 128-lane slab per gate
    Op = _round_up(O, 128)              # lane-dense output store
    Bp = _round_up(max(B, 8), 8)        # full sublanes for every vector op / store
    Dp = _round_up(D, 128)              # aligned contraction dim for the fused matmul

    # --- pad weights/biases so every gate slab is 128-lane aligned -----------
    w_ih_p = _pad_gate_cols(jnp.pad(w_ih, ((0, Dp - D), (0, 0))), H, Hp)   # (Dp, 3Hp)
    w_hh_p = _pad_gate_cols(jnp.pad(w_hh, ((0, Hp - H), (0, 0))), H, Hp)   # (Hp, 3Hp)
    b_ih_p = _pad_gate_cols(b_ih, H, Hp)                                   # (1, 3Hp)
    b_hh_p = _pad_gate_cols(b_hh, H, Hp)                                   # (1, 3Hp)
    w_fc_p = jnp.pad(w_fc, ((0, Hp - H), (0, Op - O)))                     # (Hp, Op)
    b_fc_p = jnp.pad(b_fc, ((0, 0), (0, Op - O)))                          # (1, Op)

    # Fold b_hh of the r/z gates into the input-projection bias; the n-gate hidden
    # bias stays separate (it is multiplied by r inside the recurrence).
    b_comb = b_ih_p + jnp.concatenate(
        [b_hh_p[:, :2 * Hp], jnp.zeros((1, Hp), jnp.float32)], axis=1)     # (1, 3Hp)
    b_hn = b_hh_p[:, 2 * Hp:]                                              # (1, Hp)

    # Time-major, batch padded to a sublane multiple, flattened so the fused input
    # projection is a single (T*Bp, Dp) @ (Dp, 3Hp) matmul inside the kernel.
    # (Transposing the tiny x, never the large gate tensor.)
    x_t = jnp.transpose(x.astype(jnp.float32), (1, 0, 2))                  # (T, B, D)
    x_t = jnp.pad(x_t, ((0, 0), (0, Bp - B), (0, Dp - D)))                 # (T, Bp, Dp)
    x_flat = x_t.reshape(T * Bp, Dp)

    out_p = pl.pallas_call(
        gru_kernel,
        out_shape=jax.ShapeDtypeStruct((Bp, Op), jnp.float32),
        in_specs=[pl.BlockSpec(memory_space=pltpu.MemorySpace.VMEM)] * 7,
        out_specs=pl.BlockSpec(memory_space=pltpu.MemorySpace.VMEM),
        scratch_shapes=[pltpu.VMEM((T * Bp, 3 * Hp), jnp.float32)],
    )(x_flat, w_ih_p, b_comb, w_hh_p, b_hn, w_fc_p, b_fc_p)

    return out_p[:B, :O]


def gru_reference(x, params):
    """Pure-JAX reference mirroring torch.nn.GRU(batch_first=True) + Linear."""
    w_ih, w_hh, b_ih, b_hh, w_fc, b_fc = params
    B, T, D = x.shape
    H = w_hh.shape[0]
    h = jnp.zeros((B, H), jnp.float32)
    for t in range(T):
        gx = x[:, t, :] @ w_ih + b_ih
        gh = h @ w_hh + b_hh
        r = jax.nn.sigmoid(gx[:, :H] + gh[:, :H])
        z = jax.nn.sigmoid(gx[:, H:2 * H] + gh[:, H:2 * H])
        n = jnp.tanh(gx[:, 2 * H:] + r * gh[:, 2 * H:])
        h = (1.0 - z) * n + z * h
    return h @ w_fc + b_fc


def init_params(key, input_dim, hidden_dim, output_dim):
    """Deterministic init matching PyTorch's U(-1/sqrt(H), 1/sqrt(H)) convention."""
    ks = jax.random.split(key, 6)
    stdv = 1.0 / jnp.sqrt(hidden_dim)
    w_ih = jax.random.uniform(ks[0], (input_dim, 3 * hidden_dim),
                              minval=-stdv, maxval=stdv, dtype=jnp.float32)
    w_hh = jax.random.uniform(ks[1], (hidden_dim, 3 * hidden_dim),
                              minval=-stdv, maxval=stdv, dtype=jnp.float32)
    b_ih = jax.random.uniform(ks[2], (1, 3 * hidden_dim),
                              minval=-stdv, maxval=stdv, dtype=jnp.float32)
    b_hh = jax.random.uniform(ks[3], (1, 3 * hidden_dim),
                              minval=-stdv, maxval=stdv, dtype=jnp.float32)
    w_fc = jax.random.uniform(ks[4], (hidden_dim, output_dim),
                              minval=-stdv, maxval=stdv, dtype=jnp.float32)
    b_fc = jax.random.uniform(ks[5], (1, output_dim),
                              minval=-stdv, maxval=stdv, dtype=jnp.float32)
    return (w_ih, w_hh, b_ih, b_hh, w_fc, b_fc)


if __name__ == "__main__":
    # Small shapes consistent with the module's forward: batch=2, seq=8,
    # input_dim=4, hidden_dim=32, output_dim=4. The PyTorch module constructs
    # nn.GRU with the default single layer, so num_layers is effectively 1.
    B, T, D, H, O = 2, 8, 4, 32, 4

    key = jax.random.PRNGKey(0)
    k_x, k_p = jax.random.split(key)
    x = jax.random.normal(k_x, (B, T, D), dtype=jnp.float32)
    params = init_params(k_p, D, H, O)

    out = gru_forward(x, params)
    out = jax.block_until_ready(out)

    ref = gru_reference(x, params)
    assert out.shape == (B, O)
    assert jnp.allclose(out, ref, rtol=1e-3, atol=1e-3), "Pallas GRU mismatch vs reference"

    print("KERNEL_OK")
</pallas_src>

<mosaic_0001>
module attributes {stable_mosaic.version = 11 : i64} {
  func.func @gru_kernel(%arg0: memref<64x128xf32, #tpu.memory_space<vmem>>, %arg1: memref<128x384xf32, #tpu.memory_space<vmem>>, %arg2: memref<1x384xf32, #tpu.memory_space<vmem>>, %arg3: memref<128x384xf32, #tpu.memory_space<vmem>>, %arg4: memref<1x128xf32, #tpu.memory_space<vmem>>, %arg5: memref<128x128xf32, #tpu.memory_space<vmem>>, %arg6: memref<1x128xf32, #tpu.memory_space<vmem>>, %arg7: memref<8x128xf32, #tpu.memory_space<vmem>>, %arg8: memref<64x384xf32, #tpu.memory_space<vmem>>) attributes {dimension_semantics = [], scalar_prefetch = 0 : i64, scratch_operands = 1 : i64, tpu.core_type = #tpu.core_type<tc>} {
    %c0 = arith.constant 0 : index
    %c0_0 = arith.constant 0 : index
    %0 = vector.load %arg0[%c0, %c0_0] : memref<64x128xf32, #tpu.memory_space<vmem>>, vector<64x128xf32>
    %c0_1 = arith.constant 0 : index
    %c0_2 = arith.constant 0 : index
    %1 = vector.load %arg1[%c0_1, %c0_2] : memref<128x384xf32, #tpu.memory_space<vmem>>, vector<128x384xf32>
    %cst = arith.constant dense<0.000000e+00> : vector<64x384xf32>
    %2 = tpu.matmul %0, %1, %cst {dimension_numbers = #tpu.dot_dimension_numbers<[1], [0], [0], [1], [0, 0, 1, 1], [], []>} : vector<64x128xf32>, vector<128x384xf32>, vector<64x384xf32> -> vector<64x384xf32>
    %c0_3 = arith.constant 0 : index
    %c0_4 = arith.constant 0 : index
    %3 = vector.load %arg2[%c0_3, %c0_4] : memref<1x384xf32, #tpu.memory_space<vmem>>, vector<1x384xf32>
    %4 = vector.broadcast %3 : vector<1x384xf32> to vector<64x384xf32>
    %5 = arith.addf %2, %4 : vector<64x384xf32>
    %c0_5 = arith.constant 0 : index
    %c0_6 = arith.constant 0 : index
    %6 = vector.load %arg8[%c0_5, %c0_6] : memref<64x384xf32, #tpu.memory_space<vmem>>, vector<64x384xf32>
    tpu.vector_store %arg8[%c0_5, %c0_6], %5 {strides = array<i32>} : memref<64x384xf32, #tpu.memory_space<vmem>>, vector<64x384xf32>,
    %c0_7 = arith.constant 0 : index
    %c0_8 = arith.constant 0 : index
    %7 = vector.load %arg3[%c0_7, %c0_8] : memref<128x384xf32, #tpu.memory_space<vmem>>, vector<128x384xf32>
    %c0_9 = arith.constant 0 : index
    %c0_10 = arith.constant 0 : index
    %8 = vector.load %arg4[%c0_9, %c0_10] : memref<1x128xf32, #tpu.memory_space<vmem>>, vector<1x128xf32>
    %9 = vector.shape_cast %8 : vector<1x128xf32> to vector<1x128xf32>
    %10 = vector.broadcast %9 : vector<1x128xf32> to vector<8x128xf32>
    %cst_11 = arith.constant 0.000000e+00 : f32
    %11 = vector.broadcast %cst_11 : f32 to vector<8x128xf32>
    %c0_i32 = arith.constant 0 : i32
    %c8_i32 = arith.constant 8 : i32
    %12 = arith.muli %c0_i32, %c8_i32 : i32
    %13 = tpu.assume_multiple %12, 8 : i32
    %14 = arith.index_cast %13 : i32 to index
    %c0_12 = arith.constant 0 : index
    %15 = vector.load %arg8[%14, %c0_12] : memref<64x384xf32, #tpu.memory_space<vmem>>, vector<8x384xf32>
    %cst_13 = arith.constant dense<0.000000e+00> : vector<8x384xf32>
    %16 = tpu.matmul %11, %7, %cst_13 {dimension_numbers = #tpu.dot_dimension_numbers<[1], [0], [0], [1], [0, 0, 1, 1], [], []>} : vector<8x128xf32>, vector<128x384xf32>, vector<8x384xf32> -> vector<8x384xf32>
    %17 = vector.extract_strided_slice %15 {offsets = [0, 0], sizes = [8, 128], strides = [1, 1]} : vector<8x384xf32> to vector<8x128xf32>
    %18 = vector.extract_strided_slice %16 {offsets = [0, 0], sizes = [8, 128], strides = [1, 1]} : vector<8x384xf32> to vector<8x128xf32>
    %19 = arith.addf %17, %18 : vector<8x128xf32>
    %20 = arith.negf %19 : vector<8x128xf32>
    %21 = math.exp %20 : vector<8x128xf32>
    %cst_14 = arith.constant 1.000000e+00 : f32
    %22 = vector.broadcast %cst_14 : f32 to vector<8x128xf32>
    %23 = arith.addf %22, %21 : vector<8x128xf32>
    %24 = arith.divf %22, %23 : vector<8x128xf32>
    %25 = vector.extract_strided_slice %15 {offsets = [0, 256], sizes = [8, 128], strides = [1, 1]} : vector<8x384xf32> to vector<8x128xf32>
    %26 = vector.extract_strided_slice %16 {offsets = [0, 256], sizes = [8, 128], strides = [1, 1]} : vector<8x384xf32> to vector<8x128xf32>
    %27 = arith.addf %26, %10 : vector<8x128xf32>
    %28 = arith.mulf %24, %27 : vector<8x128xf32>
    %29 = arith.addf %25, %28 : vector<8x128xf32>
    %30 = vector.extract_strided_slice %15 {offsets = [0, 128], sizes = [8, 128], strides = [1, 1]} : vector<8x384xf32> to vector<8x128xf32>
    %31 = vector.extract_strided_slice %16 {offsets = [0, 128], sizes = [8, 128], strides = [1, 1]} : vector<8x384xf32> to vector<8x128xf32>
    %32 = arith.addf %30, %31 : vector<8x128xf32>
    %33 = arith.negf %32 : vector<8x128xf32>
    %34 = math.exp %33 : vector<8x128xf32>
    %cst_15 = arith.constant 1.000000e+00 : f32
    %35 = vector.broadcast %cst_15 : f32 to vector<8x128xf32>
    %36 = arith.addf %35, %34 : vector<8x128xf32>
    %37 = arith.divf %35, %36 : vector<8x128xf32>
    %38 = math.tanh %29 : vector<8x128xf32>
    %cst_16 = arith.constant 1.000000e+00 : f32
    %39 = vector.broadcast %cst_16 : f32 to vector<8x128xf32>
    %40 = arith.subf %39, %37 : vector<8x128xf32>
    %41 = arith.mulf %40, %38 : vector<8x128xf32>
    %42 = arith.mulf %37, %11 : vector<8x128xf32>
    %43 = arith.addf %41, %42 : vector<8x128xf32>
    %c1_i32 = arith.constant 1 : i32
    %c8_i32_17 = arith.constant 8 : i32
    %44 = arith.muli %c1_i32, %c8_i32_17 : i32
    %45 = tpu.assume_multiple %44, 8 : i32
    %46 = arith.index_cast %45 : i32 to index
    %c0_18 = arith.constant 0 : index
    %47 = vector.load %arg8[%46, %c0_18] : memref<64x384xf32, #tpu.memory_space<vmem>>, vector<8x384xf32>
    %cst_19 = arith.constant dense<0.000000e+00> : vector<8x384xf32>
    %48 = tpu.matmul %43, %7, %cst_19 {dimension_numbers = #tpu.dot_dimension_numbers<[1], [0], [0], [1], [0, 0, 1, 1], [], []>} : vector<8x128xf32>, vector<128x384xf32>, vector<8x384xf32> -> vector<8x384xf32>
    %49 = vector.extract_strided_slice %47 {offsets = [0, 0], sizes = [8, 128], strides = [1, 1]} : vector<8x384xf32> to vector<8x128xf32>
    %50 = vector.extract_strided_slice %48 {offsets = [0, 0], sizes = [8, 128], strides = [1, 1]} : vector<8x384xf32> to vector<8x128xf32>
    %51 = arith.addf %49, %50 : vector<8x128xf32>
    %52 = arith.negf %51 : vector<8x128xf32>
    %53 = math.exp %52 : vector<8x128xf32>
    %cst_20 = arith.constant 1.000000e+00 : f32
    %54 = vector.broadcast %cst_20 : f32 to vector<8x128xf32>
    %55 = arith.addf %54, %53 : vector<8x128xf32>
    %56 = arith.divf %54, %55 : vector<8x128xf32>
    %57 = vector.extract_strided_slice %47 {offsets = [0, 256], sizes = [8, 128], strides = [1, 1]} : vector<8x384xf32> to vector<8x128xf32>
    %58 = vector.extract_strided_slice %48 {offsets = [0, 256], sizes = [8, 128], strides = [1, 1]} : vector<8x384xf32> to vector<8x128xf32>
    %59 = arith.addf %58, %10 : vector<8x128xf32>
    %60 = arith.mulf %56, %59 : vector<8x128xf32>
    %61 = arith.addf %57, %60 : vector<8x128xf32>
    %62 = vector.extract_strided_slice %47 {offsets = [0, 128], sizes = [8, 128], strides = [1, 1]} : vector<8x384xf32> to vector<8x128xf32>
    %63 = vector.extract_strided_slice %48 {offsets = [0, 128], sizes = [8, 128], strides = [1, 1]} : vector<8x384xf32> to vector<8x128xf32>
    %64 = arith.addf %62, %63 : vector<8x128xf32>
    %65 = arith.negf %64 : vector<8x128xf32>
    %66 = math.exp %65 : vector<8x128xf32>
    %cst_21 = arith.constant 1.000000e+00 : f32
    %67 = vector.broadcast %cst_21 : f32 to vector<8x128xf32>
    %68 = arith.addf %67, %66 : vector<8x128xf32>
    %69 = arith.divf %67, %68 : vector<8x128xf32>
    %70 = math.tanh %61 : vector<8x128xf32>
    %cst_22 = arith.constant 1.000000e+00 : f32
    %71 = vector.broadcast %cst_22 : f32 to vector<8x128xf32>
    %72 = arith.subf %71, %69 : vector<8x128xf32>
    %73 = arith.mulf %72, %70 : vector<8x128xf32>
    %74 = arith.mulf %69, %43 : vector<8x128xf32>
    %75 = arith.addf %73, %74 : vector<8x128xf32>
    %c2_i32 = arith.constant 2 : i32
    %c8_i32_23 = arith.constant 8 : i32
    %76 = arith.muli %c2_i32, %c8_i32_23 : i32
    %77 = tpu.assume_multiple %76, 8 : i32
    %78 = arith.index_cast %77 : i32 to index
    %c0_24 = arith.constant 0 : index
    %79 = vector.load %arg8[%78, %c0_24] : memref<64x384xf32, #tpu.memory_space<vmem>>, vector<8x384xf32>
    %cst_25 = arith.constant dense<0.000000e+00> : vector<8x384xf32>
    %80 = tpu.matmul %75, %7, %cst_25 {dimension_numbers = #tpu.dot_dimension_numbers<[1], [0], [0], [1], [0, 0, 1, 1], [], []>} : vector<8x128xf32>, vector<128x384xf32>, vector<8x384xf32> -> vector<8x384xf32>
    %81 = vector.extract_strided_slice %79 {offsets = [0, 0], sizes = [8, 128], strides = [1, 1]} : vector<8x384xf32> to vector<8x128xf32>
    %82 = vector.extract_strided_slice %80 {offsets = [0, 0], sizes = [8, 128], strides = [1, 1]} : vector<8x384xf32> to vector<8x128xf32>
    %83 = arith.addf %81, %82 : vector<8x128xf32>
    %84 = arith.negf %83 : vector<8x128xf32>
    %85 = math.exp %84 : vector<8x128xf32>
    %cst_26 = arith.constant 1.000000e+00 : f32
    %86 = vector.broadcast %cst_26 : f32 to vector<8x128xf32>
    %87 = arith.addf %86, %85 : vector<8x128xf32>
    %88 = arith.divf %86, %87 : vector<8x128xf32>
    %89 = vector.extract_strided_slice %79 {offsets = [0, 256], sizes = [8, 128], strides = [1, 1]} : vector<8x384xf32> to vector<8x128xf32>
    %90 = vector.extract_strided_slice %80 {offsets = [0, 256], sizes = [8, 128], strides = [1, 1]} : vector<8x384xf32> to vector<8x128xf32>
    %91 = arith.addf %90, %10 : vector<8x128xf32>
    %92 = arith.mulf %88, %91 : vector<8x128xf32>
    %93 = arith.addf %89, %92 : vector<8x128xf32>
    %94 = vector.extract_strided_slice %79 {offsets = [0, 128], sizes = [8, 128], strides = [1, 1]} : vector<8x384xf32> to vector<8x128xf32>
    %95 = vector.extract_strided_slice %80 {offsets = [0, 128], sizes = [8, 128], strides = [1, 1]} : vector<8x384xf32> to vector<8x128xf32>
    %96 = arith.addf %94, %95 : vector<8x128xf32>
    %97 = arith.negf %96 : vector<8x128xf32>
    %98 = math.exp %97 : vector<8x128xf32>
    %cst_27 = arith.constant 1.000000e+00 : f32
    %99 = vector.broadcast %cst_27 : f32 to vector<8x128xf32>
    %100 = arith.addf %99, %98 : vector<8x128xf32>
    %101 = arith.divf %99, %100 : vector<8x128xf32>
    %102 = math.tanh %93 : vector<8x128xf32>
    %cst_28 = arith.constant 1.000000e+00 : f32
    %103 = vector.broadcast %cst_28 : f32 to vector<8x128xf32>
    %104 = arith.subf %103, %101 : vector<8x128xf32>
    %105 = arith.mulf %104, %102 : vector<8x128xf32>
    %106 = arith.mulf %101, %75 : vector<8x128xf32>
    %107 = arith.addf %105, %106 : vector<8x128xf32>
    %c3_i32 = arith.constant 3 : i32
    %c8_i32_29 = arith.constant 8 : i32
    %108 = arith.muli %c3_i32, %c8_i32_29 : i32
    %109 = tpu.assume_multiple %108, 8 : i32
    %110 = arith.index_cast %109 : i32 to index
    %c0_30 = arith.constant 0 : index
    %111 = vector.load %arg8[%110, %c0_30] : memref<64x384xf32, #tpu.memory_space<vmem>>, vector<8x384xf32>
    %cst_31 = arith.constant dense<0.000000e+00> : vector<8x384xf32>
    %112 = tpu.matmul %107, %7, %cst_31 {dimension_numbers = #tpu.dot_dimension_numbers<[1], [0], [0], [1], [0, 0, 1, 1], [], []>} : vector<8x128xf32>, vector<128x384xf32>, vector<8x384xf32> -> vector<8x384xf32>
    %113 = vector.extract_strided_slice %111 {offsets = [0, 0], sizes = [8, 128], strides = [1, 1]} : vector<8x384xf32> to vector<8x128xf32>
    %114 = vector.extract_strided_slice %112 {offsets = [0, 0], sizes = [8, 128], strides = [1, 1]} : vector<8x384xf32> to vector<8x128xf32>
    %115 = arith.addf %113, %114 : vector<8x128xf32>
    %116 = arith.negf %115 : vector<8x128xf32>
    %117 = math.exp %116 : vector<8x128xf32>
    %cst_32 = arith.constant 1.000000e+00 : f32
    %118 = vector.broadcast %cst_32 : f32 to vector<8x128xf32>
    %119 = arith.addf %118, %117 : vector<8x128xf32>
    %120 = arith.divf %118, %119 : vector<8x128xf32>
    %121 = vector.extract_strided_slice %111 {offsets = [0, 256], sizes = [8, 128], strides = [1, 1]} : vector<8x384xf32> to vector<8x128xf32>
    %122 = vector.extract_strided_slice %112 {offsets = [0, 256], sizes = [8, 128], strides = [1, 1]} : vector<8x384xf32> to vector<8x128xf32>
    %123 = arith.addf %122, %10 : vector<8x128xf32>
    %124 = arith.mulf %120, %123 : vector<8x128xf32>
    %125 = arith.addf %121, %124 : vector<8x128xf32>
    %126 = vector.extract_strided_slice %111 {offsets = [0, 128], sizes = [8, 128], strides = [1, 1]} : vector<8x384xf32> to vector<8x128xf32>
    %127 = vector.extract_strided_slice %112 {offsets = [0, 128], sizes = [8, 128], strides = [1, 1]} : vector<8x384xf32> to vector<8x128xf32>
    %128 = arith.addf %126, %127 : vector<8x128xf32>
    %129 = arith.negf %128 : vector<8x128xf32>
    %130 = math.exp %129 : vector<8x128xf32>
    %cst_33 = arith.constant 1.000000e+00 : f32
    %131 = vector.broadcast %cst_33 : f32 to vector<8x128xf32>
    %132 = arith.addf %131, %130 : vector<8x128xf32>
    %133 = arith.divf %131, %132 : vector<8x128xf32>
    %134 = math.tanh %125 : vector<8x128xf32>
    %cst_34 = arith.constant 1.000000e+00 : f32
    %135 = vector.broadcast %cst_34 : f32 to vector<8x128xf32>
    %136 = arith.subf %135, %133 : vector<8x128xf32>
    %137 = arith.mulf %136, %134 : vector<8x128xf32>
    %138 = arith.mulf %133, %107 : vector<8x128xf32>
    %139 = arith.addf %137, %138 : vector<8x128xf32>
    %c4_i32 = arith.constant 4 : i32
    %c8_i32_35 = arith.constant 8 : i32
    %140 = arith.muli %c4_i32, %c8_i32_35 : i32
    %141 = tpu.assume_multiple %140, 8 : i32
    %142 = arith.index_cast %141 : i32 to index
    %c0_36 = arith.constant 0 : index
    %143 = vector.load %arg8[%142, %c0_36] : memref<64x384xf32, #tpu.memory_space<vmem>>, vector<8x384xf32>
    %cst_37 = arith.constant dense<0.000000e+00> : vector<8x384xf32>
    %144 = tpu.matmul %139, %7, %cst_37 {dimension_numbers = #tpu.dot_dimension_numbers<[1], [0], [0], [1], [0, 0, 1, 1], [], []>} : vector<8x128xf32>, vector<128x384xf32>, vector<8x384xf32> -> vector<8x384xf32>
    %145 = vector.extract_strided_slice %143 {offsets = [0, 0], sizes = [8, 128], strides = [1, 1]} : vector<8x384xf32> to vector<8x128xf32>
    %146 = vector.extract_strided_slice %144 {offsets = [0, 0], sizes = [8, 128], strides = [1, 1]} : vector<8x384xf32> to vector<8x128xf32>
    %147 = arith.addf %145, %146 : vector<8x128xf32>
    %148 = arith.negf %147 : vector<8x128xf32>
    %149 = math.exp %148 : vector<8x128xf32>
    %cst_38 = arith.constant 1.000000e+00 : f32
    %150 = vector.broadcast %cst_38 : f32 to vector<8x128xf32>
    %151 = arith.addf %150, %149 : vector<8x128xf32>
    %152 = arith.divf %150, %151 : vector<8x128xf32>
    %153 = vector.extract_strided_slice %143 {offsets = [0, 256], sizes = [8, 128], strides = [1, 1]} : vector<8x384xf32> to vector<8x128xf32>
    %154 = vector.extract_strided_slice %144 {offsets = [0, 256], sizes = [8, 128], strides = [1, 1]} : vector<8x384xf32> to vector<8x128xf32>
    %155 = arith.addf %154, %10 : vector<8x128xf32>
    %156 = arith.mulf %152, %155 : vector<8x128xf32>
    %157 = arith.addf %153, %156 : vector<8x128xf32>
    %158 = vector.extract_strided_slice %143 {offsets = [0, 128], sizes = [8, 128], strides = [1, 1]} : vector<8x384xf32> to vector<8x128xf32>
    %159 = vector.extract_strided_slice %144 {offsets = [0, 128], sizes = [8, 128], strides = [1, 1]} : vector<8x384xf32> to vector<8x128xf32>
    %160 = arith.addf %158, %159 : vector<8x128xf32>
    %161 = arith.negf %160 : vector<8x128xf32>
    %162 = math.exp %161 : vector<8x128xf32>
    %cst_39 = arith.constant 1.000000e+00 : f32
    %163 = vector.broadcast %cst_39 : f32 to vector<8x128xf32>
    %164 = arith.addf %163, %162 : vector<8x128xf32>
    %165 = arith.divf %163, %164 : vector<8x128xf32>
    %166 = math.tanh %157 : vector<8x128xf32>
    %cst_40 = arith.constant 1.000000e+00 : f32
    %167 = vector.broadcast %cst_40 : f32 to vector<8x128xf32>
    %168 = arith.subf %167, %165 : vector<8x128xf32>
    %169 = arith.mulf %168, %166 : vector<8x128xf32>
    %170 = arith.mulf %165, %139 : vector<8x128xf32>
    %171 = arith.addf %169, %170 : vector<8x128xf32>
    %c5_i32 = arith.constant 5 : i32
    %c8_i32_41 = arith.constant 8 : i32
    %172 = arith.muli %c5_i32, %c8_i32_41 : i32
    %173 = tpu.assume_multiple %172, 8 : i32
    %174 = arith.index_cast %173 : i32 to index
    %c0_42 = arith.constant 0 : index
    %175 = vector.load %arg8[%174, %c0_42] : memref<64x384xf32, #tpu.memory_space<vmem>>, vector<8x384xf32>
    %cst_43 = arith.constant dense<0.000000e+00> : vector<8x384xf32>
    %176 = tpu.matmul %171, %7, %cst_43 {dimension_numbers = #tpu.dot_dimension_numbers<[1], [0], [0], [1], [0, 0, 1, 1], [], []>} : vector<8x128xf32>, vector<128x384xf32>, vector<8x384xf32> -> vector<8x384xf32>
    %177 = vector.extract_strided_slice %175 {offsets = [0, 0], sizes = [8, 128], strides = [1, 1]} : vector<8x384xf32> to vector<8x128xf32>
    %178 = vector.extract_strided_slice %176 {offsets = [0, 0], sizes = [8, 128], strides = [1, 1]} : vector<8x384xf32> to vector<8x128xf32>
    %179 = arith.addf %177, %178 : vector<8x128xf32>
    %180 = arith.negf %179 : vector<8x128xf32>
    %181 = math.exp %180 : vector<8x128xf32>
    %cst_44 = arith.constant 1.000000e+00 : f32
    %182 = vector.broadcast %cst_44 : f32 to vector<8x128xf32>
    %183 = arith.addf %182, %181 : vector<8x128xf32>
    %184 = arith.divf %182, %183 : vector<8x128xf32>
    %185 = vector.extract_strided_slice %175 {offsets = [0, 256], sizes = [8, 128], strides = [1, 1]} : vector<8x384xf32> to vector<8x128xf32>
    %186 = vector.extract_strided_slice %176 {offsets = [0, 256], sizes = [8, 128], strides = [1, 1]} : vector<8x384xf32> to vector<8x128xf32>
    %187 = arith.addf %186, %10 : vector<8x128xf32>
    %188 = arith.mulf %184, %187 : vector<8x128xf32>
    %189 = arith.addf %185, %188 : vector<8x128xf32>
    %190 = vector.extract_strided_slice %175 {offsets = [0, 128], sizes = [8, 128], strides = [1, 1]} : vector<8x384xf32> to vector<8x128xf32>
    %191 = vector.extract_strided_slice %176 {offsets = [0, 128], sizes = [8, 128], strides = [1, 1]} : vector<8x384xf32> to vector<8x128xf32>
    %192 = arith.addf %190, %191 : vector<8x128xf32>
    %193 = arith.negf %192 : vector<8x128xf32>
    %194 = math.exp %193 : vector<8x128xf32>
    %cst_45 = arith.constant 1.000000e+00 : f32
    %195 = vector.broadcast %cst_45 : f32 to vector<8x128xf32>
    %196 = arith.addf %195, %194 : vector<8x128xf32>
    %197 = arith.divf %195, %196 : vector<8x128xf32>
    %198 = math.tanh %189 : vector<8x128xf32>
    %cst_46 = arith.constant 1.000000e+00 : f32
    %199 = vector.broadcast %cst_46 : f32 to vector<8x128xf32>
    %200 = arith.subf %199, %197 : vector<8x128xf32>
    %201 = arith.mulf %200, %198 : vector<8x128xf32>
    %202 = arith.mulf %197, %171 : vector<8x128xf32>
    %203 = arith.addf %201, %202 : vector<8x128xf32>
    %c6_i32 = arith.constant 6 : i32
    %c8_i32_47 = arith.constant 8 : i32
    %204 = arith.muli %c6_i32, %c8_i32_47 : i32
    %205 = tpu.assume_multiple %204, 8 : i32
    %206 = arith.index_cast %205 : i32 to index
    %c0_48 = arith.constant 0 : index
    %207 = vector.load %arg8[%206, %c0_48] : memref<64x384xf32, #tpu.memory_space<vmem>>, vector<8x384xf32>
    %cst_49 = arith.constant dense<0.000000e+00> : vector<8x384xf32>
    %208 = tpu.matmul %203, %7, %cst_49 {dimension_numbers = #tpu.dot_dimension_numbers<[1], [0], [0], [1], [0, 0, 1, 1], [], []>} : vector<8x128xf32>, vector<128x384xf32>, vector<8x384xf32> -> vector<8x384xf32>
    %209 = vector.extract_strided_slice %207 {offsets = [0, 0], sizes = [8, 128], strides = [1, 1]} : vector<8x384xf32> to vector<8x128xf32>
    %210 = vector.extract_strided_slice %208 {offsets = [0, 0], sizes = [8, 128], strides = [1, 1]} : vector<8x384xf32> to vector<8x128xf32>
    %211 = arith.addf %209, %210 : vector<8x128xf32>
    %212 = arith.negf %211 : vector<8x128xf32>
    %213 = math.exp %212 : vector<8x128xf32>
    %cst_50 = arith.constant 1.000000e+00 : f32
    %214 = vector.broadcast %cst_50 : f32 to vector<8x128xf32>
    %215 = arith.addf %214, %213 : vector<8x128xf32>
    %216 = arith.divf %214, %215 : vector<8x128xf32>
    %217 = vector.extract_strided_slice %207 {offsets = [0, 256], sizes = [8, 128], strides = [1, 1]} : vector<8x384xf32> to vector<8x128xf32>
    %218 = vector.extract_strided_slice %208 {offsets = [0, 256], sizes = [8, 128], strides = [1, 1]} : vector<8x384xf32> to vector<8x128xf32>
    %219 = arith.addf %218, %10 : vector<8x128xf32>
    %220 = arith.mulf %216, %219 : vector<8x128xf32>
    %221 = arith.addf %217, %220 : vector<8x128xf32>
    %222 = vector.extract_strided_slice %207 {offsets = [0, 128], sizes = [8, 128], strides = [1, 1]} : vector<8x384xf32> to vector<8x128xf32>
    %223 = vector.extract_strided_slice %208 {offsets = [0, 128], sizes = [8, 128], strides = [1, 1]} : vector<8x384xf32> to vector<8x128xf32>
    %224 = arith.addf %222, %223 : vector<8x128xf32>
    %225 = arith.negf %224 : vector<8x128xf32>
    %226 = math.exp %225 : vector<8x128xf32>
    %cst_51 = arith.constant 1.000000e+00 : f32
    %227 = vector.broadcast %cst_51 : f32 to vector<8x128xf32>
    %228 = arith.addf %227, %226 : vector<8x128xf32>
    %229 = arith.divf %227, %228 : vector<8x128xf32>
    %230 = math.tanh %221 : vector<8x128xf32>
    %cst_52 = arith.constant 1.000000e+00 : f32
    %231 = vector.broadcast %cst_52 : f32 to vector<8x128xf32>
    %232 = arith.subf %231, %229 : vector<8x128xf32>
    %233 = arith.mulf %232, %230 : vector<8x128xf32>
    %234 = arith.mulf %229, %203 : vector<8x128xf32>
    %235 = arith.addf %233, %234 : vector<8x128xf32>
    %c7_i32 = arith.constant 7 : i32
    %c8_i32_53 = arith.constant 8 : i32
    %236 = arith.muli %c7_i32, %c8_i32_53 : i32
    %237 = tpu.assume_multiple %236, 8 : i32
    %238 = arith.index_cast %237 : i32 to index
    %c0_54 = arith.constant 0 : index
    %239 = vector.load %arg8[%238, %c0_54] : memref<64x384xf32, #tpu.memory_space<vmem>>, vector<8x384xf32>
    %cst_55 = arith.constant dense<0.000000e+00> : vector<8x384xf32>
    %240 = tpu.matmul %235, %7, %cst_55 {dimension_numbers = #tpu.dot_dimension_numbers<[1], [0], [0], [1], [0, 0, 1, 1], [], []>} : vector<8x128xf32>, vector<128x384xf32>, vector<8x384xf32> -> vector<8x384xf32>
    %241 = vector.extract_strided_slice %239 {offsets = [0, 0], sizes = [8, 128], strides = [1, 1]} : vector<8x384xf32> to vector<8x128xf32>
    %242 = vector.extract_strided_slice %240 {offsets = [0, 0], sizes = [8, 128], strides = [1, 1]} : vector<8x384xf32> to vector<8x128xf32>
    %243 = arith.addf %241, %242 : vector<8x128xf32>
    %244 = arith.negf %243 : vector<8x128xf32>
    %245 = math.exp %244 : vector<8x128xf32>
    %cst_56 = arith.constant 1.000000e+00 : f32
    %246 = vector.broadcast %cst_56 : f32 to vector<8x128xf32>
    %247 = arith.addf %246, %245 : vector<8x128xf32>
    %248 = arith.divf %246, %247 : vector<8x128xf32>
    %249 = vector.extract_strided_slice %239 {offsets = [0, 256], sizes = [8, 128], strides = [1, 1]} : vector<8x384xf32> to vector<8x128xf32>
    %250 = vector.extract_strided_slice %240 {offsets = [0, 256], sizes = [8, 128], strides = [1, 1]} : vector<8x384xf32> to vector<8x128xf32>
    %251 = arith.addf %250, %10 : vector<8x128xf32>
    %252 = arith.mulf %248, %251 : vector<8x128xf32>
    %253 = arith.addf %249, %252 : vector<8x128xf32>
    %254 = vector.extract_strided_slice %239 {offsets = [0, 128], sizes = [8, 128], strides = [1, 1]} : vector<8x384xf32> to vector<8x128xf32>
    %255 = vector.extract_strided_slice %240 {offsets = [0, 128], sizes = [8, 128], strides = [1, 1]} : vector<8x384xf32> to vector<8x128xf32>
    %256 = arith.addf %254, %255 : vector<8x128xf32>
    %257 = arith.negf %256 : vector<8x128xf32>
    %258 = math.exp %257 : vector<8x128xf32>
    %cst_57 = arith.constant 1.000000e+00 : f32
    %259 = vector.broadcast %cst_57 : f32 to vector<8x128xf32>
    %260 = arith.addf %259, %258 : vector<8x128xf32>
    %261 = arith.divf %259, %260 : vector<8x128xf32>
    %262 = math.tanh %253 : vector<8x128xf32>
    %cst_58 = arith.constant 1.000000e+00 : f32
    %263 = vector.broadcast %cst_58 : f32 to vector<8x128xf32>
    %264 = arith.subf %263, %261 : vector<8x128xf32>
    %265 = arith.mulf %264, %262 : vector<8x128xf32>
    %266 = arith.mulf %261, %235 : vector<8x128xf32>
    %267 = arith.addf %265, %266 : vector<8x128xf32>
    %c8_i32_59 = arith.constant 8 : i32
    %c0_60 = arith.constant 0 : index
    %c0_61 = arith.constant 0 : index
    %268 = vector.load %arg5[%c0_60, %c0_61] : memref<128x128xf32, #tpu.memory_space<vmem>>, vector<128x128xf32>
    %cst_62 = arith.constant dense<0.000000e+00> : vector<8x128xf32>
    %269 = tpu.matmul %267, %268, %cst_62 {dimension_numbers = #tpu.dot_dimension_numbers<[1], [0], [0], [1], [0, 0, 1, 1], [], []>} : vector<8x128xf32>, vector<128x128xf32>, vector<8x128xf32> -> vector<8x128xf32>
    %c0_63 = arith.constant 0 : index
    %c0_64 = arith.constant 0 : index
    %270 = vector.load %arg6[%c0_63, %c0_64] : memref<1x128xf32, #tpu.memory_space<vmem>>, vector<1x128xf32>
    %271 = vector.broadcast %270 : vector<1x128xf32> to vector<8x128xf32>
    %272 = arith.addf %269, %271 : vector<8x128xf32>
    %c0_65 = arith.constant 0 : index
    %c0_66 = arith.constant 0 : index
    %273 = vector.load %arg7[%c0_65, %c0_66] : memref<8x128xf32, #tpu.memory_space<vmem>>, vector<8x128xf32>
    tpu.vector_store %arg7[%c0_65, %c0_66], %272 {strides = array<i32>} : memref<8x128xf32, #tpu.memory_space<vmem>>, vector<8x128xf32>,
    return
  }
}

</mosaic_0001>

<llo_original>
// kernel: gru_forward.1
$region0: #{gru_forward.1}
  #allocation0 [shape = 'u32[]', space=smem, size = 0x4, offset = 0x4, fixed_abs, tag = 'smem constant byte address 0x4 - core index']
  #allocation1 [shape = 'u32[72,128]{1,0:T(1,128)}', space=vmem, size = 0x9000, scoped, tag = 'internal scratch']
  #allocation2 [shape = 'f32[64,384]{1,0:T(8,128)}', space=vmem, size = 0x18000, scoped, tag = 'scratch operand']
  %s0 = inlined_call_operand.vmem [shape: f32[64,128], index: 0, kind: input, shape index: {}]
  %s1 = inlined_call_operand.vmem [shape: f32[128,384], index: 1, kind: input, shape index: {}]
  %s2 = inlined_call_operand.vmem [shape: f32[1,384], index: 2, kind: input, shape index: {}]
  %s3 = inlined_call_operand.vmem [shape: f32[128,384], index: 3, kind: input, shape index: {}]
  %s4 = inlined_call_operand.vmem [shape: f32[1,128], index: 4, kind: input, shape index: {}]
  %s5 = inlined_call_operand.vmem [shape: f32[128,128], index: 5, kind: input, shape index: {}]
  %s6 = inlined_call_operand.vmem [shape: f32[1,128], index: 6, kind: input, shape index: {}]
  %s7 = inlined_call_operand.vmem [shape: f32[8,128], index: 7, kind: output, shape index: {}]
  %s8 = sld [smem:[#allocation0]]
  $region38: #{gru_forward.1} parent=0
    _
  %s10 = ssub.s32 1, %s8
  %s11 = scalar_select 0, %s10, %s8
  // Predicated region
  $region2: #{gru_forward.1} parent=0 // pred_check
    _
  $region3: #{gru_forward.1} parent=0 // pred_check_branch
    %13 = sbr.rel (0) target = $region5
  $region4: #{gru_forward.1} parent=0 // pred_region
    _
  $region5: #{gru_forward.1} parent=0 // pred_fallthru
    _
  // Predicated region
  $region6: #{gru_forward.1} parent=0 // pred_check
    _
  $region7: #{gru_forward.1} parent=0 // pred_check_branch
    %15 = sbr.rel (0) target = $region9
  $region8: #{gru_forward.1} parent=0 // pred_region
    _
  $region9: #{gru_forward.1} parent=0 // pred_fallthru
    _
  // Predicated region
  $region10: #{gru_forward.1} parent=0 // pred_check
    _
  $region11: #{gru_forward.1} parent=0 // pred_check_branch
    %17 = sbr.rel (0) target = $region13
  $region12: #{gru_forward.1} parent=0 // pred_region
    _
  $region13: #{gru_forward.1} parent=0 // pred_fallthru
    _
  // Predicated region
  $region14: #{gru_forward.1} parent=0 // pred_check
    _
  $region15: #{gru_forward.1} parent=0 // pred_check_branch
    %19 = sbr.rel (0) target = $region17
  $region16: #{gru_forward.1} parent=0 // pred_region
    _
  $region17: #{gru_forward.1} parent=0 // pred_fallthru
    _
  // Predicated region
  $region18: #{gru_forward.1} parent=0 // pred_check
    _
  $region19: #{gru_forward.1} parent=0 // pred_check_branch
    %21 = sbr.rel (0) target = $region21
  $region20: #{gru_forward.1} parent=0 // pred_region
    _
  $region21: #{gru_forward.1} parent=0 // pred_fallthru
    _
  // Predicated region
  $region22: #{gru_forward.1} parent=0 // pred_check
    _
  $region23: #{gru_forward.1} parent=0 // pred_check_branch
    %23 = sbr.rel (0) target = $region25
  $region24: #{gru_forward.1} parent=0 // pred_region
    _
  $region25: #{gru_forward.1} parent=0 // pred_fallthru
    _
  // Predicated region
  $region26: #{gru_forward.1} parent=0 // pred_check
    _
  $region27: #{gru_forward.1} parent=0 // pred_check_branch
    %25 = sbr.rel (0) target = $region29
  $region28: #{gru_forward.1} parent=0 // pred_region
    _
  $region29: #{gru_forward.1} parent=0 // pred_fallthru
    _
  %v26 = vld [vmem:[%s0] sm:$0xff]
  %v27 = vld [vmem:[%s0 + $0x8] sm:$0xff]
  %v28 = vld [vmem:[%s0 + $0x10] sm:$0xff]
  %v29 = vld [vmem:[%s0 + $0x18] sm:$0xff]
  %v30 = vld [vmem:[%s0 + $0x20] sm:$0xff]
  %v31 = vld [vmem:[%s0 + $0x28] sm:$0xff]
  %v32 = vld [vmem:[%s0 + $0x30] sm:$0xff]
  %v33 = vld [vmem:[%s0 + $0x38] sm:$0xff]
  %v34 = vld [vmem:[%s1] sm:$0xff]
  %v35 = vld [vmem:[%s1 + $0x8] sm:$0xff]
  %v36 = vld [vmem:[%s1 + $0x10] sm:$0xff]
  %v37 = vld [vmem:[%s1 + $0x18] sm:$0xff]
  %v38 = vld [vmem:[%s1 + $0x20] sm:$0xff]
  %v39 = vld [vmem:[%s1 + $0x28] sm:$0xff]
  %v40 = vld [vmem:[%s1 + $0x30] sm:$0xff]
  %v41 = vld [vmem:[%s1 + $0x38] sm:$0xff]
  %v42 = vld [vmem:[%s1 + $0x40] sm:$0xff]
  %v43 = vld [vmem:[%s1 + $0x48] sm:$0xff]
  %v44 = vld [vmem:[%s1 + $0x50] sm:$0xff]
  %v45 = vld [vmem:[%s1 + $0x58] sm:$0xff]
  %v46 = vld [vmem:[%s1 + $0x60] sm:$0xff]
  %v47 = vld [vmem:[%s1 + $0x68] sm:$0xff]
  %v48 = vld [vmem:[%s1 + $0x70] sm:$0xff]
  %v49 = vld [vmem:[%s1 + $0x78] sm:$0xff]
  %v50 = vld [vmem:[%s1 + $0x80] sm:$0xff]
  %v51 = vld [vmem:[%s1 + $0x88] sm:$0xff]
  %v52 = vld [vmem:[%s1 + $0x90] sm:$0xff]
  %v53 = vld [vmem:[%s1 + $0x98] sm:$0xff]
  %v54 = vld [vmem:[%s1 + $0xa0] sm:$0xff]
  %v55 = vld [vmem:[%s1 + $0xa8] sm:$0xff]
  %v56 = vld [vmem:[%s1 + $0xb0] sm:$0xff]
  %v57 = vld [vmem:[%s1 + $0xb8] sm:$0xff]
  %v58 = vld [vmem:[%s1 + $0xc0] sm:$0xff]
  %v59 = vld [vmem:[%s1 + $0xc8] sm:$0xff]
  %v60 = vld [vmem:[%s1 + $0xd0] sm:$0xff]
  %v61 = vld [vmem:[%s1 + $0xd8] sm:$0xff]
  %v62 = vld [vmem:[%s1 + $0xe0] sm:$0xff]
  %v63 = vld [vmem:[%s1 + $0xe8] sm:$0xff]
  %v64 = vld [vmem:[%s1 + $0xf0] sm:$0xff]
  %v65 = vld [vmem:[%s1 + $0xf8] sm:$0xff]
  %v66 = vld [vmem:[%s1 + $0x100] sm:$0xff]
  %v67 = vld [vmem:[%s1 + $0x108] sm:$0xff]
  %v68 = vld [vmem:[%s1 + $0x110] sm:$0xff]
  %v69 = vld [vmem:[%s1 + $0x118] sm:$0xff]
  %v70 = vld [vmem:[%s1 + $0x120] sm:$0xff]
  %v71 = vld [vmem:[%s1 + $0x128] sm:$0xff]
  %v72 = vld [vmem:[%s1 + $0x130] sm:$0xff]
  %v73 = vld [vmem:[%s1 + $0x138] sm:$0xff]
  %v74 = vld [vmem:[%s1 + $0x140] sm:$0xff]
  %v75 = vld [vmem:[%s1 + $0x148] sm:$0xff]
  %v76 = vld [vmem:[%s1 + $0x150] sm:$0xff]
  %v77 = vld [vmem:[%s1 + $0x158] sm:$0xff]
  %v78 = vld [vmem:[%s1 + $0x160] sm:$0xff]
  %v79 = vld [vmem:[%s1 + $0x168] sm:$0xff]
  %v80 = vld [vmem:[%s1 + $0x170] sm:$0xff]
  %v81 = vld [vmem:[%s1 + $0x178] sm:$0xff]
  %v82 = vld [vmem:[%s2] sm:$0x7]
  %v84 = vperm.slane %v82, 0
  %v85 = vperm.slane %v82, 1
  %v86 = vperm.slane %v82, 2
  %90 = vmatpush.msra.mxu0 %v79
  %91 = vmatpush.msra.mxu0 %v76
  %92 = vmatpush.msra.mxu0 %v73
  %93 = vmatpush.msra.mxu0 %v70
  %94 = vmatpush.msra.mxu0 %v67
  %95 = vmatpush.msra.mxu0 %v64
  %96 = vmatpush.msra.mxu0 %v61
  %97 = vmatpush.msra.mxu0 %v58
  %98 = vmatpush.msra.mxu0 %v55
  %99 = vmatpush.msra.mxu0 %v52
  %100 = vmatpush.msra.mxu0 %v49
  %101 = vmatpush.msra.mxu0 %v46
  %102 = vmatpush.msra.mxu0 %v43
  %103 = vmatpush.msra.mxu0 %v40
  %104 = vmatpush.msra.mxu0 %v37
  %105 = vmatpush.msra.mxu0 %v34
  %106 = vmatmul.f32.gmra.mxu0 %v26
  %v107 = vpop.f32.mrf.mxu0
  %v108 = vadd.f32 %v84, %v107
  %109 = vmatmul.f32.gmra.mxu0 %v27
  %v110 = vpop.f32.mrf.mxu0
  %v111 = vadd.f32 %v84, %v110
  %112 = vmatmul.f32.gmra.mxu0 %v28
  %v113 = vpop.f32.mrf.mxu0
  %v114 = vadd.f32 %v84, %v113
  %115 = vmatmul.f32.gmra.mxu0 %v29
  %v116 = vpop.f32.mrf.mxu0
  %v117 = vadd.f32 %v84, %v116
  %118 = vmatmul.f32.gmra.mxu0 %v30
  %v119 = vpop.f32.mrf.mxu0
  %v120 = vadd.f32 %v84, %v119
  %121 = vmatmul.f32.gmra.mxu0 %v31
  %v122 = vpop.f32.mrf.mxu0
  %v123 = vadd.f32 %v84, %v122
  %124 = vmatmul.f32.gmra.mxu0 %v32
  %v125 = vpop.f32.mrf.mxu0
  %v126 = vadd.f32 %v84, %v125
  %127 = vmatmul.f32.gmra.mxu0 %v33
  %v128 = vpop.f32.mrf.mxu0
  %v129 = vadd.f32 %v84, %v128
  %130 = vdwg.mxu0
  %131 = vmatpush.msra.mxu0 %v80
  %132 = vmatpush.msra.mxu0 %v77
  %133 = vmatpush.msra.mxu0 %v74
  %134 = vmatpush.msra.mxu0 %v71
  %135 = vmatpush.msra.mxu0 %v68
  %136 = vmatpush.msra.mxu0 %v65
  %137 = vmatpush.msra.mxu0 %v62
  %138 = vmatpush.msra.mxu0 %v59
  %139 = vmatpush.msra.mxu0 %v56
  %140 = vmatpush.msra.mxu0 %v53
  %141 = vmatpush.msra.mxu0 %v50
  %142 = vmatpush.msra.mxu0 %v47
  %143 = vmatpush.msra.mxu0 %v44
  %144 = vmatpush.msra.mxu0 %v41
  %145 = vmatpush.msra.mxu0 %v38
  %146 = vmatpush.msra.mxu0 %v35
  %147 = vmatmul.f32.gmra.mxu0 %v26
  %v148 = vpop.f32.mrf.mxu0
  %v149 = vadd.f32 %v85, %v148
  %150 = vmatmul.f32.gmra.mxu0 %v27
  %v151 = vpop.f32.mrf.mxu0
  %v152 = vadd.f32 %v85, %v151
  %153 = vmatmul.f32.gmra.mxu0 %v28
  %v154 = vpop.f32.mrf.mxu0
  %v155 = vadd.f32 %v85, %v154
  %156 = vmatmul.f32.gmra.mxu0 %v29
  %v157 = vpop.f32.mrf.mxu0
  %v158 = vadd.f32 %v85, %v157
  %159 = vmatmul.f32.gmra.mxu0 %v30
  %v160 = vpop.f32.mrf.mxu0
  %v161 = vadd.f32 %v85, %v160
  %162 = vmatmul.f32.gmra.mxu0 %v31
  %v163 = vpop.f32.mrf.mxu0
  %v164 = vadd.f32 %v85, %v163
  %165 = vmatmul.f32.gmra.mxu0 %v32
  %v166 = vpop.f32.mrf.mxu0
  %v167 = vadd.f32 %v85, %v166
  %168 = vmatmul.f32.gmra.mxu0 %v33
  %v169 = vpop.f32.mrf.mxu0
  %v170 = vadd.f32 %v85, %v169
  %171 = vdwg.mxu0
  %172 = vmatpush.msra.mxu0 %v81
  %173 = vmatpush.msra.mxu0 %v78
  %174 = vmatpush.msra.mxu0 %v75
  %175 = vmatpush.msra.mxu0 %v72
  %176 = vmatpush.msra.mxu0 %v69
  %177 = vmatpush.msra.mxu0 %v66
  %178 = vmatpush.msra.mxu0 %v63
  %179 = vmatpush.msra.mxu0 %v60
  %180 = vmatpush.msra.mxu0 %v57
  %181 = vmatpush.msra.mxu0 %v54
  %182 = vmatpush.msra.mxu0 %v51
  %183 = vmatpush.msra.mxu0 %v48
  %184 = vmatpush.msra.mxu0 %v45
  %185 = vmatpush.msra.mxu0 %v42
  %186 = vmatpush.msra.mxu0 %v39
  %187 = vmatpush.msra.mxu0 %v36
  %188 = vmatmul.f32.gmra.mxu0 %v26
  %v189 = vpop.f32.mrf.mxu0
  %v190 = vadd.f32 %v86, %v189
  %191 = vmatmul.f32.gmra.mxu0 %v27
  %v192 = vpop.f32.mrf.mxu0
  %v193 = vadd.f32 %v86, %v192
  %194 = vmatmul.f32.gmra.mxu0 %v28
  %v195 = vpop.f32.mrf.mxu0
  %v196 = vadd.f32 %v86, %v195
  %197 = vmatmul.f32.gmra.mxu0 %v29
  %v198 = vpop.f32.mrf.mxu0
  %v199 = vadd.f32 %v86, %v198
  %200 = vmatmul.f32.gmra.mxu0 %v30
  %v201 = vpop.f32.mrf.mxu0
  %v202 = vadd.f32 %v86, %v201
  %203 = vmatmul.f32.gmra.mxu0 %v31
  %v204 = vpop.f32.mrf.mxu0
  %v205 = vadd.f32 %v86, %v204
  %206 = vmatmul.f32.gmra.mxu0 %v32
  %v207 = vpop.f32.mrf.mxu0
  %v208 = vadd.f32 %v86, %v207
  %209 = vmatmul.f32.gmra.mxu0 %v33
  %v210 = vpop.f32.mrf.mxu0
  %v211 = vadd.f32 %v86, %v210
  %212 = vdwg.mxu0
  %213 = vst [vmem:[#allocation2] sm:$0xff] %v108
  %214 = vst [vmem:[#allocation2 + $0x8] sm:$0xff] %v149
  %215 = vst [vmem:[#allocation2 + $0x10] sm:$0xff] %v190
  %216 = vst [vmem:[#allocation2 + $0x18] sm:$0xff] %v111
  %217 = vst [vmem:[#allocation2 + $0x20] sm:$0xff] %v152
  %218 = vst [vmem:[#allocation2 + $0x28] sm:$0xff] %v193
  %219 = vst [vmem:[#allocation2 + $0x30] sm:$0xff] %v114
  %220 = vst [vmem:[#allocation2 + $0x38] sm:$0xff] %v155
  %221 = vst [vmem:[#allocation2 + $0x40] sm:$0xff] %v196
  %222 = vst [vmem:[#allocation2 + $0x48] sm:$0xff] %v117
  %223 = vst [vmem:[#allocation2 + $0x50] sm:$0xff] %v158
  %224 = vst [vmem:[#allocation2 + $0x58] sm:$0xff] %v199
  %225 = vst [vmem:[#allocation2 + $0x60] sm:$0xff] %v120
  %226 = vst [vmem:[#allocation2 + $0x68] sm:$0xff] %v161
  %227 = vst [vmem:[#allocation2 + $0x70] sm:$0xff] %v202
  %228 = vst [vmem:[#allocation2 + $0x78] sm:$0xff] %v123
  %229 = vst [vmem:[#allocation2 + $0x80] sm:$0xff] %v164
  %230 = vst [vmem:[#allocation2 + $0x88] sm:$0xff] %v205
  %231 = vst [vmem:[#allocation2 + $0x90] sm:$0xff] %v126
  %232 = vst [vmem:[#allocation2 + $0x98] sm:$0xff] %v167
  %233 = vst [vmem:[#allocation2 + $0xa0] sm:$0xff] %v208
  %234 = vst [vmem:[#allocation2 + $0xa8] sm:$0xff] %v129
  %235 = vst [vmem:[#allocation2 + $0xb0] sm:$0xff] %v170
  %236 = vst [vmem:[#allocation2 + $0xb8] sm:$0xff] %v211
  %v237 = vld [vmem:[%s3] sm:$0xff]
  %v238 = vld [vmem:[%s3 + $0x8] sm:$0xff]
  %v239 = vld [vmem:[%s3 + $0x10] sm:$0xff]
  %v240 = vld [vmem:[%s3 + $0x18] sm:$0xff]
  %v241 = vld [vmem:[%s3 + $0x20] sm:$0xff]
  %v242 = vld [vmem:[%s3 + $0x28] sm:$0xff]
  %v243 = vld [vmem:[%s3 + $0x30] sm:$0xff]
  %v244 = vld [vmem:[%s3 + $0x38] sm:$0xff]
  %v245 = vld [vmem:[%s3 + $0x40] sm:$0xff]
  %v246 = vld [vmem:[%s3 + $0x48] sm:$0xff]
  %v247 = vld [vmem:[%s3 + $0x50] sm:$0xff]
  %v248 = vld [vmem:[%s3 + $0x58] sm:$0xff]
  %v249 = vld [vmem:[%s3 + $0x60] sm:$0xff]
  %v250 = vld [vmem:[%s3 + $0x68] sm:$0xff]
  %v251 = vld [vmem:[%s3 + $0x70] sm:$0xff]
  %v252 = vld [vmem:[%s3 + $0x78] sm:$0xff]
  %v253 = vld [vmem:[%s3 + $0x80] sm:$0xff]
  %v254 = vld [vmem:[%s3 + $0x88] sm:$0xff]
  %v255 = vld [vmem:[%s3 + $0x90] sm:$0xff]
  %v256 = vld [vmem:[%s3 + $0x98] sm:$0xff]
  %v257 = vld [vmem:[%s3 + $0xa0] sm:$0xff]
  %v258 = vld [vmem:[%s3 + $0xa8] sm:$0xff]
  %v259 = vld [vmem:[%s3 + $0xb0] sm:$0xff]
  %v260 = vld [vmem:[%s3 + $0xb8] sm:$0xff]
  %v261 = vld [vmem:[%s3 + $0xc0] sm:$0xff]
  %v262 = vld [vmem:[%s3 + $0xc8] sm:$0xff]
  %v263 = vld [vmem:[%s3 + $0xd0] sm:$0xff]
  %v264 = vld [vmem:[%s3 + $0xd8] sm:$0xff]
  %v265 = vld [vmem:[%s3 + $0xe0] sm:$0xff]
  %v266 = vld [vmem:[%s3 + $0xe8] sm:$0xff]
  %v267 = vld [vmem:[%s3 + $0xf0] sm:$0xff]
  %v268 = vld [vmem:[%s3 + $0xf8] sm:$0xff]
  %v269 = vld [vmem:[%s3 + $0x100] sm:$0xff]
  %v270 = vld [vmem:[%s3 + $0x108] sm:$0xff]
  %v271 = vld [vmem:[%s3 + $0x110] sm:$0xff]
  %v272 = vld [vmem:[%s3 + $0x118] sm:$0xff]
  %v273 = vld [vmem:[%s3 + $0x120] sm:$0xff]
  %v274 = vld [vmem:[%s3 + $0x128] sm:$0xff]
  %v275 = vld [vmem:[%s3 + $0x130] sm:$0xff]
  %v276 = vld [vmem:[%s3 + $0x138] sm:$0xff]
  %v277 = vld [vmem:[%s3 + $0x140] sm:$0xff]
  %v278 = vld [vmem:[%s3 + $0x148] sm:$0xff]
  %v279 = vld [vmem:[%s3 + $0x150] sm:$0xff]
  %v280 = vld [vmem:[%s3 + $0x158] sm:$0xff]
  %v281 = vld [vmem:[%s3 + $0x160] sm:$0xff]
  %v282 = vld [vmem:[%s3 + $0x168] sm:$0xff]
  %v283 = vld [vmem:[%s3 + $0x170] sm:$0xff]
  %v284 = vld [vmem:[%s3 + $0x178] sm:$0xff]
  %v285 = vld [vmem:[%s4] sm:$0x1]
  %v287 = vperm.slane %v285, 0
  %s289 = smul.u32 0, 3
  %s290 = smul.addr %s289, 8
  %s291 = scalar_lea.vmem [#allocation2], %s290
  %v292 = vld [vmem:[%s291] sm:$0xff]
  %v293 = vld [vmem:[%s291 + $0x8] sm:$0xff]
  %v294 = vld [vmem:[%s291 + $0x10] sm:$0xff]
  %295 = vmatpush.msra.mxu0 %v282
  %296 = vmatpush.msra.mxu0 %v279
  %297 = vmatpush.msra.mxu0 %v276
  %298 = vmatpush.msra.mxu0 %v273
  %299 = vmatpush.msra.mxu0 %v270
  %300 = vmatpush.msra.mxu0 %v267
  %301 = vmatpush.msra.mxu0 %v264
  %302 = vmatpush.msra.mxu0 %v261
  %303 = vmatpush.msra.mxu0 %v258
  %304 = vmatpush.msra.mxu0 %v255
  %305 = vmatpush.msra.mxu0 %v252
  %306 = vmatpush.msra.mxu0 %v249
  %307 = vmatpush.msra.mxu0 %v246
  %308 = vmatpush.msra.mxu0 %v243
  %309 = vmatpush.msra.mxu0 %v240
  %310 = vmatpush.msra.mxu0 %v237
  %311 = vmatmul.f32.gmra.mxu0 0.0
  %v312 = vpop.f32.mrf.mxu0
  %v313 = vadd.f32 0.0, %v312
  %314 = vdwg.mxu0
  %315 = vmatpush.msra.mxu0 %v283
  %316 = vmatpush.msra.mxu0 %v280
  %317 = vmatpush.msra.mxu0 %v277
  %318 = vmatpush.msra.mxu0 %v274
  %319 = vmatpush.msra.mxu0 %v271
  %320 = vmatpush.msra.mxu0 %v268
  %321 = vmatpush.msra.mxu0 %v265
  %322 = vmatpush.msra.mxu0 %v262
  %323 = vmatpush.msra.mxu0 %v259
  %324 = vmatpush.msra.mxu0 %v256
  %325 = vmatpush.msra.mxu0 %v253
  %326 = vmatpush.msra.mxu0 %v250
  %327 = vmatpush.msra.mxu0 %v247
  %328 = vmatpush.msra.mxu0 %v244
  %329 = vmatpush.msra.mxu0 %v241
  %330 = vmatpush.msra.mxu0 %v238
  %331 = vmatmul.f32.gmra.mxu0 0.0
  %v332 = vpop.f32.mrf.mxu0
  %v333 = vadd.f32 0.0, %v332
  %334 = vdwg.mxu0
  %335 = vmatpush.msra.mxu0 %v284
  %336 = vmatpush.msra.mxu0 %v281
  %337 = vmatpush.msra.mxu0 %v278
  %338 = vmatpush.msra.mxu0 %v275
  %339 = vmatpush.msra.mxu0 %v272
  %340 = vmatpush.msra.mxu0 %v269
  %341 = vmatpush.msra.mxu0 %v266
  %342 = vmatpush.msra.mxu0 %v263
  %343 = vmatpush.msra.mxu0 %v260
  %344 = vmatpush.msra.mxu0 %v257
  %345 = vmatpush.msra.mxu0 %v254
  %346 = vmatpush.msra.mxu0 %v251
  %347 = vmatpush.msra.mxu0 %v248
  %348 = vmatpush.msra.mxu0 %v245
  %349 = vmatpush.msra.mxu0 %v242
  %350 = vmatpush.msra.mxu0 %v239
  %351 = vmatmul.f32.gmra.mxu0 0.0
  %v352 = vpop.f32.mrf.mxu0
  %v353 = vadd.f32 0.0, %v352
  %354 = vdwg.mxu0
  %v355 = vadd.f32 %v292, %v313
  %v356 = vxor.u32 %v355, 2147483648
  %v357 = vmul.f32 %v356, 1.442695
  %v358 = vpow.pop %v357
  %v359 = vadd.f32 %v358, 1.0
  %v360 = vrcp.pop %v359
  %v361 = vmul.f32 %v359, %v360
  %v362 = vsub.f32 1.0, %v361
  %v363 = vmul.f32 %v360, %v362
  %v364 = vadd.f32 %v360, %v363
  %vm365 = vweird.f32 %v359
  %vm366 = vweird.f32 %v360
  %vm367 = vmor %vm365, %vm366
  %v368 = vsel %vm367, %v360, %v364
  %v369 = vand.u32 2147483647, %v359
  %vm370 = vcmp.eq.f32.partialorder %v369, 8.507059e+37
  %v371 = vand.u32 %v359, 2147483648
  %v372 = vor.u32 1.1754944e-38, %v371
  %v373 = vsel %vm370, %v372, %v368
  %v374 = vmul.f32 1.0, %v373
  %v375 = vadd.f32 %v353, %v287
  %v376 = vmul.f32 %v374, %v375
  %v377 = vadd.f32 %v294, %v376
  %v378 = vadd.f32 %v293, %v333
  %v379 = vxor.u32 %v378, 2147483648
  %v380 = vmul.f32 %v379, 1.442695
  %v381 = vpow.pop %v380
  %v382 = vadd.f32 %v381, 1.0
  %v383 = vrcp.pop %v382
  %v384 = vmul.f32 %v382, %v383
  %v385 = vsub.f32 1.0, %v384
  %v386 = vmul.f32 %v383, %v385
  %v387 = vadd.f32 %v383, %v386
  %vm388 = vweird.f32 %v382
  %vm389 = vweird.f32 %v383
  %vm390 = vmor %vm388, %vm389
  %v391 = vsel %vm390, %v383, %v387
  %v392 = vand.u32 2147483647, %v382
  %vm393 = vcmp.eq.f32.partialorder %v392, 8.507059e+37
  %v394 = vand.u32 %v382, 2147483648
  %v395 = vor.u32 1.1754944e-38, %v394
  %v396 = vsel %vm393, %v395, %v391
  %v397 = vmul.f32 1.0, %v396
  %v398 = vtanh.pop %v377
  %v399 = vsub.f32 1.0, %v397
  %v400 = vmul.f32 %v399, %v398
  %v401 = vmul.f32 %v397, 0.0
  %v402 = vadd.f32 %v400, %v401
  %s403 = smul.u32 1, 3
  %s404 = smul.addr %s403, 8
  %s405 = scalar_lea.vmem [#allocation2], %s404
  %v406 = vld [vmem:[%s405] sm:$0xff]
  %v407 = vld [vmem:[%s405 + $0x8] sm:$0xff]
  %v408 = vld [vmem:[%s405 + $0x10] sm:$0xff]
  %409 = vmatpush.msra.mxu0 %v282
  %410 = vmatpush.msra.mxu0 %v279
  %411 = vmatpush.msra.mxu0 %v276
  %412 = vmatpush.msra.mxu0 %v273
  %413 = vmatpush.msra.mxu0 %v270
  %414 = vmatpush.msra.mxu0 %v267
  %415 = vmatpush.msra.mxu0 %v264
  %416 = vmatpush.msra.mxu0 %v261
  %417 = vmatpush.msra.mxu0 %v258
  %418 = vmatpush.msra.mxu0 %v255
  %419 = vmatpush.msra.mxu0 %v252
  %420 = vmatpush.msra.mxu0 %v249
  %421 = vmatpush.msra.mxu0 %v246
  %422 = vmatpush.msra.mxu0 %v243
  %423 = vmatpush.msra.mxu0 %v240
  %424 = vmatpush.msra.mxu0 %v237
  %425 = vmatmul.f32.gmra.mxu0 %v402
  %v426 = vpop.f32.mrf.mxu0
  %v427 = vadd.f32 0.0, %v426
  %428 = vdwg.mxu0
  %429 = vmatpush.msra.mxu0 %v283
  %430 = vmatpush.msra.mxu0 %v280
  %431 = vmatpush.msra.mxu0 %v277
  %432 = vmatpush.msra.mxu0 %v274
  %433 = vmatpush.msra.mxu0 %v271
  %434 = vmatpush.msra.mxu0 %v268
  %435 = vmatpush.msra.mxu0 %v265
  %436 = vmatpush.msra.mxu0 %v262
  %437 = vmatpush.msra.mxu0 %v259
  %438 = vmatpush.msra.mxu0 %v256
  %439 = vmatpush.msra.mxu0 %v253
  %440 = vmatpush.msra.mxu0 %v250
  %441 = vmatpush.msra.mxu0 %v247
  %442 = vmatpush.msra.mxu0 %v244
  %443 = vmatpush.msra.mxu0 %v241
  %444 = vmatpush.msra.mxu0 %v238
  %445 = vmatmul.f32.gmra.mxu0 %v402
  %v446 = vpop.f32.mrf.mxu0
  %v447 = vadd.f32 0.0, %v446
  %448 = vdwg.mxu0
  %449 = vmatpush.msra.mxu0 %v284
  %450 = vmatpush.msra.mxu0 %v281
  %451 = vmatpush.msra.mxu0 %v278
  %452 = vmatpush.msra.mxu0 %v275
  %453 = vmatpush.msra.mxu0 %v272
  %454 = vmatpush.msra.mxu0 %v269
  %455 = vmatpush.msra.mxu0 %v266
  %456 = vmatpush.msra.mxu0 %v263
  %457 = vmatpush.msra.mxu0 %v260
  %458 = vmatpush.msra.mxu0 %v257
  %459 = vmatpush.msra.mxu0 %v254
  %460 = vmatpush.msra.mxu0 %v251
  %461 = vmatpush.msra.mxu0 %v248
  %462 = vmatpush.msra.mxu0 %v245
  %463 = vmatpush.msra.mxu0 %v242
  %464 = vmatpush.msra.mxu0 %v239
  %465 = vmatmul.f32.gmra.mxu0 %v402
  %v466 = vpop.f32.mrf.mxu0
  %v467 = vadd.f32 0.0, %v466
  %468 = vdwg.mxu0
  %v469 = vadd.f32 %v406, %v427
  %v470 = vxor.u32 %v469, 2147483648
  %v471 = vmul.f32 %v470, 1.442695
  %v472 = vpow.pop %v471
  %v473 = vadd.f32 %v472, 1.0
  %v474 = vrcp.pop %v473
  %v475 = vmul.f32 %v473, %v474
  %v476 = vsub.f32 1.0, %v475
  %v477 = vmul.f32 %v474, %v476
  %v478 = vadd.f32 %v474, %v477
  %vm479 = vweird.f32 %v473
  %vm480 = vweird.f32 %v474
  %vm481 = vmor %vm479, %vm480
  %v482 = vsel %vm481, %v474, %v478
  %v483 = vand.u32 2147483647, %v473
  %vm484 = vcmp.eq.f32.partialorder %v483, 8.507059e+37
  %v485 = vand.u32 %v473, 2147483648
  %v486 = vor.u32 1.1754944e-38, %v485
  %v487 = vsel %vm484, %v486, %v482
  %v488 = vmul.f32 1.0, %v487
  %v489 = vadd.f32 %v467, %v287
  %v490 = vmul.f32 %v488, %v489
  %v491 = vadd.f32 %v408, %v490
  %v492 = vadd.f32 %v407, %v447
  %v493 = vxor.u32 %v492, 2147483648
  %v494 = vmul.f32 %v493, 1.442695
  %v495 = vpow.pop %v494
  %v496 = vadd.f32 %v495, 1.0
  %v497 = vrcp.pop %v496
  %v498 = vmul.f32 %v496, %v497
  %v499 = vsub.f32 1.0, %v498
  %v500 = vmul.f32 %v497, %v499
  %v501 = vadd.f32 %v497, %v500
  %vm502 = vweird.f32 %v496
  %vm503 = vweird.f32 %v497
  %vm504 = vmor %vm502, %vm503
  %v505 = vsel %vm504, %v497, %v501
  %v506 = vand.u32 2147483647, %v496
  %vm507 = vcmp.eq.f32.partialorder %v506, 8.507059e+37
  %v508 = vand.u32 %v496, 2147483648
  %v509 = vor.u32 1.1754944e-38, %v508
  %v510 = vsel %vm507, %v509, %v505
  %v511 = vmul.f32 1.0, %v510
  %v512 = vtanh.pop %v491
  %v513 = vsub.f32 1.0, %v511
  %v514 = vmul.f32 %v513, %v512
  %v515 = vmul.f32 %v511, %v402
  %v516 = vadd.f32 %v514, %v515
  %s517 = smul.u32 2, 3
  %s518 = smul.addr %s517, 8
  %s519 = scalar_lea.vmem [#allocation2], %s518
  %v520 = vld [vmem:[%s519] sm:$0xff]
  %v521 = vld [vmem:[%s519 + $0x8] sm:$0xff]
  %v522 = vld [vmem:[%s519 + $0x10] sm:$0xff]
  %523 = vmatpush.msra.mxu0 %v282
  %524 = vmatpush.msra.mxu0 %v279
  %525 = vmatpush.msra.mxu0 %v276
  %526 = vmatpush.msra.mxu0 %v273
  %527 = vmatpush.msra.mxu0 %v270
  %528 = vmatpush.msra.mxu0 %v267
  %529 = vmatpush.msra.mxu0 %v264
  %530 = vmatpush.msra.mxu0 %v261
  %531 = vmatpush.msra.mxu0 %v258
  %532 = vmatpush.msra.mxu0 %v255
  %533 = vmatpush.msra.mxu0 %v252
  %534 = vmatpush.msra.mxu0 %v249
  %535 = vmatpush.msra.mxu0 %v246
  %536 = vmatpush.msra.mxu0 %v243
  %537 = vmatpush.msra.mxu0 %v240
  %538 = vmatpush.msra.mxu0 %v237
  %539 = vmatmul.f32.gmra.mxu0 %v516
  %v540 = vpop.f32.mrf.mxu0
  %v541 = vadd.f32 0.0, %v540
  %542 = vdwg.mxu0
  %543 = vmatpush.msra.mxu0 %v283
  %544 = vmatpush.msra.mxu0 %v280
  %545 = vmatpush.msra.mxu0 %v277
  %546 = vmatpush.msra.mxu0 %v274
  %547 = vmatpush.msra.mxu0 %v271
  %548 = vmatpush.msra.mxu0 %v268
  %549 = vmatpush.msra.mxu0 %v265
  %550 = vmatpush.msra.mxu0 %v262
  %551 = vmatpush.msra.mxu0 %v259
  %552 = vmatpush.msra.mxu0 %v256
  %553 = vmatpush.msra.mxu0 %v253
  %554 = vmatpush.msra.mxu0 %v250
  %555 = vmatpush.msra.mxu0 %v247
  %556 = vmatpush.msra.mxu0 %v244
  %557 = vmatpush.msra.mxu0 %v241
  %558 = vmatpush.msra.mxu0 %v238
  %559 = vmatmul.f32.gmra.mxu0 %v516
  %v560 = vpop.f32.mrf.mxu0
  %v561 = vadd.f32 0.0, %v560
  %562 = vdwg.mxu0
  %563 = vmatpush.msra.mxu0 %v284
  %564 = vmatpush.msra.mxu0 %v281
  %565 = vmatpush.msra.mxu0 %v278
  %566 = vmatpush.msra.mxu0 %v275
  %567 = vmatpush.msra.mxu0 %v272
  %568 = vmatpush.msra.mxu0 %v269
  %569 = vmatpush.msra.mxu0 %v266
  %570 = vmatpush.msra.mxu0 %v263
  %571 = vmatpush.msra.mxu0 %v260
  %572 = vmatpush.msra.mxu0 %v257
  %573 = vmatpush.msra.mxu0 %v254
  %574 = vmatpush.msra.mxu0 %v251
  %575 = vmatpush.msra.mxu0 %v248
  %576 = vmatpush.msra.mxu0 %v245
  %577 = vmatpush.msra.mxu0 %v242
  %578 = vmatpush.msra.mxu0 %v239
  %579 = vmatmul.f32.gmra.mxu0 %v516
  %v580 = vpop.f32.mrf.mxu0
  %v581 = vadd.f32 0.0, %v580
  %582 = vdwg.mxu0
  %v583 = vadd.f32 %v520, %v541
  %v584 = vxor.u32 %v583, 2147483648
  %v585 = vmul.f32 %v584, 1.442695
  %v586 = vpow.pop %v585
  %v587 = vadd.f32 %v586, 1.0
  %v588 = vrcp.pop %v587
  %v589 = vmul.f32 %v587, %v588
  %v590 = vsub.f32 1.0, %v589
  %v591 = vmul.f32 %v588, %v590
  %v592 = vadd.f32 %v588, %v591
  %vm593 = vweird.f32 %v587
  %vm594 = vweird.f32 %v588
  %vm595 = vmor %vm593, %vm594
  %v596 = vsel %vm595, %v588, %v592
  %v597 = vand.u32 2147483647, %v587
  %vm598 = vcmp.eq.f32.partialorder %v597, 8.507059e+37
  %v599 = vand.u32 %v587, 2147483648
  %v600 = vor.u32 1.1754944e-38, %v599
  %v601 = vsel %vm598, %v600, %v596
  %v602 = vmul.f32 1.0, %v601
  %v603 = vadd.f32 %v581, %v287
  %v604 = vmul.f32 %v602, %v603
  %v605 = vadd.f32 %v522, %v604
  %v606 = vadd.f32 %v521, %v561
  %v607 = vxor.u32 %v606, 2147483648
  %v608 = vmul.f32 %v607, 1.442695
  %v609 = vpow.pop %v608
  %v610 = vadd.f32 %v609, 1.0
  %v611 = vrcp.pop %v610
  %v612 = vmul.f32 %v610, %v611
  %v613 = vsub.f32 1.0, %v612
  %v614 = vmul.f32 %v611, %v613
  %v615 = vadd.f32 %v611, %v614
  %vm616 = vweird.f32 %v610
  %vm617 = vweird.f32 %v611
  %vm618 = vmor %vm616, %vm617
  %v619 = vsel %vm618, %v611, %v615
  %v620 = vand.u32 2147483647, %v610
  %vm621 = vcmp.eq.f32.partialorder %v620, 8.507059e+37
  %v622 = vand.u32 %v610, 2147483648
  %v623 = vor.u32 1.1754944e-38, %v622
  %v624 = vsel %vm621, %v623, %v619
  %v625 = vmul.f32 1.0, %v624
  %v626 = vtanh.pop %v605
  %v627 = vsub.f32 1.0, %v625
  %v628 = vmul.f32 %v627, %v626
  %v629 = vmul.f32 %v625, %v516
  %v630 = vadd.f32 %v628, %v629
  %s631 = smul.u32 3, 3
  %s632 = smul.addr %s631, 8
  %s633 = scalar_lea.vmem [#allocation2], %s632
  %v634 = vld [vmem:[%s633] sm:$0xff]
  %v635 = vld [vmem:[%s633 + $0x8] sm:$0xff]
  %v636 = vld [vmem:[%s633 + $0x10] sm:$0xff]
  %637 = vmatpush.msra.mxu0 %v282
  %638 = vmatpush.msra.mxu0 %v279
  %639 = vmatpush.msra.mxu0 %v276
  %640 = vmatpush.msra.mxu0 %v273
  %641 = vmatpush.msra.mxu0 %v270
  %642 = vmatpush.msra.mxu0 %v267
  %643 = vmatpush.msra.mxu0 %v264
  %644 = vmatpush.msra.mxu0 %v261
  %645 = vmatpush.msra.mxu0 %v258
  %646 = vmatpush.msra.mxu0 %v255
  %647 = vmatpush.msra.mxu0 %v252
  %648 = vmatpush.msra.mxu0 %v249
  %649 = vmatpush.msra.mxu0 %v246
  %650 = vmatpush.msra.mxu0 %v243
  %651 = vmatpush.msra.mxu0 %v240
  %652 = vmatpush.msra.mxu0 %v237
  %653 = vmatmul.f32.gmra.mxu0 %v630
  %v654 = vpop.f32.mrf.mxu0
  %v655 = vadd.f32 0.0, %v654
  %656 = vdwg.mxu0
  %657 = vmatpush.msra.mxu0 %v283
  %658 = vmatpush.msra.mxu0 %v280
  %659 = vmatpush.msra.mxu0 %v277
  %660 = vmatpush.msra.mxu0 %v274
  %661 = vmatpush.msra.mxu0 %v271
  %662 = vmatpush.msra.mxu0 %v268
  %663 = vmatpush.msra.mxu0 %v265
  %664 = vmatpush.msra.mxu0 %v262
  %665 = vmatpush.msra.mxu0 %v259
  %666 = vmatpush.msra.mxu0 %v256
  %667 = vmatpush.msra.mxu0 %v253
  %668 = vmatpush.msra.mxu0 %v250
  %669 = vmatpush.msra.mxu0 %v247
  %670 = vmatpush.msra.mxu0 %v244
  %671 = vmatpush.msra.mxu0 %v241
  %672 = vmatpush.msra.mxu0 %v238
  %673 = vmatmul.f32.gmra.mxu0 %v630
  %v674 = vpop.f32.mrf.mxu0
  %v675 = vadd.f32 0.0, %v674
  %676 = vdwg.mxu0
  %677 = vmatpush.msra.mxu0 %v284
  %678 = vmatpush.msra.mxu0 %v281
  %679 = vmatpush.msra.mxu0 %v278
  %680 = vmatpush.msra.mxu0 %v275
  %681 = vmatpush.msra.mxu0 %v272
  %682 = vmatpush.msra.mxu0 %v269
  %683 = vmatpush.msra.mxu0 %v266
  %684 = vmatpush.msra.mxu0 %v263
  %685 = vmatpush.msra.mxu0 %v260
  %686 = vmatpush.msra.mxu0 %v257
  %687 = vmatpush.msra.mxu0 %v254
  %688 = vmatpush.msra.mxu0 %v251
  %689 = vmatpush.msra.mxu0 %v248
  %690 = vmatpush.msra.mxu0 %v245
  %691 = vmatpush.msra.mxu0 %v242
  %692 = vmatpush.msra.mxu0 %v239
  %693 = vmatmul.f32.gmra.mxu0 %v630
  %v694 = vpop.f32.mrf.mxu0
  %v695 = vadd.f32 0.0, %v694
  %696 = vdwg.mxu0
  %v697 = vadd.f32 %v634, %v655
  %v698 = vxor.u32 %v697, 2147483648
  %v699 = vmul.f32 %v698, 1.442695
  %v700 = vpow.pop %v699
  %v701 = vadd.f32 %v700, 1.0
  %v702 = vrcp.pop %v701
  %v703 = vmul.f32 %v701, %v702
  %v704 = vsub.f32 1.0, %v703
  %v705 = vmul.f32 %v702, %v704
  %v706 = vadd.f32 %v702, %v705
  %vm707 = vweird.f32 %v701
  %vm708 = vweird.f32 %v702
  %vm709 = vmor %vm707, %vm708
  %v710 = vsel %vm709, %v702, %v706
  %v711 = vand.u32 2147483647, %v701
  %vm712 = vcmp.eq.f32.partialorder %v711, 8.507059e+37
  %v713 = vand.u32 %v701, 2147483648
  %v714 = vor.u32 1.1754944e-38, %v713
  %v715 = vsel %vm712, %v714, %v710
  %v716 = vmul.f32 1.0, %v715
  %v717 = vadd.f32 %v695, %v287
  %v718 = vmul.f32 %v716, %v717
  %v719 = vadd.f32 %v636, %v718
  %v720 = vadd.f32 %v635, %v675
  %v721 = vxor.u32 %v720, 2147483648
  %v722 = vmul.f32 %v721, 1.442695
  %v723 = vpow.pop %v722
  %v724 = vadd.f32 %v723, 1.0
  %v725 = vrcp.pop %v724
  %v726 = vmul.f32 %v724, %v725
  %v727 = vsub.f32 1.0, %v726
  %v728 = vmul.f32 %v725, %v727
  %v729 = vadd.f32 %v725, %v728
  %vm730 = vweird.f32 %v724
  %vm731 = vweird.f32 %v725
  %vm732 = vmor %vm730, %vm731
  %v733 = vsel %vm732, %v725, %v729
  %v734 = vand.u32 2147483647, %v724
  %vm735 = vcmp.eq.f32.partialorder %v734, 8.507059e+37
  %v736 = vand.u32 %v724, 2147483648
  %v737 = vor.u32 1.1754944e-38, %v736
  %v738 = vsel %vm735, %v737, %v733
  %v739 = vmul.f32 1.0, %v738
  %v740 = vtanh.pop %v719
  %v741 = vsub.f32 1.0, %v739
  %v742 = vmul.f32 %v741, %v740
  %v743 = vmul.f32 %v739, %v630
  %v744 = vadd.f32 %v742, %v743
  %s745 = smul.u32 4, 3
  %s746 = smul.addr %s745, 8
  %s747 = scalar_lea.vmem [#allocation2], %s746
  %v748 = vld [vmem:[%s747] sm:$0xff]
  %v749 = vld [vmem:[%s747 + $0x8] sm:$0xff]
  %v750 = vld [vmem:[%s747 + $0x10] sm:$0xff]
  %751 = vmatpush.msra.mxu0 %v282
  %752 = vmatpush.msra.mxu0 %v279
  %753 = vmatpush.msra.mxu0 %v276
  %754 = vmatpush.msra.mxu0 %v273
  %755 = vmatpush.msra.mxu0 %v270
  %756 = vmatpush.msra.mxu0 %v267
  %757 = vmatpush.msra.mxu0 %v264
  %758 = vmatpush.msra.mxu0 %v261
  %759 = vmatpush.msra.mxu0 %v258
  %760 = vmatpush.msra.mxu0 %v255
  %761 = vmatpush.msra.mxu0 %v252
  %762 = vmatpush.msra.mxu0 %v249
  %763 = vmatpush.msra.mxu0 %v246
  %764 = vmatpush.msra.mxu0 %v243
  %765 = vmatpush.msra.mxu0 %v240
  %766 = vmatpush.msra.mxu0 %v237
  %767 = vmatmul.f32.gmra.mxu0 %v744
  %v768 = vpop.f32.mrf.mxu0
  %v769 = vadd.f32 0.0, %v768
  %770 = vdwg.mxu0
  %771 = vmatpush.msra.mxu0 %v283
  %772 = vmatpush.msra.mxu0 %v280
  %773 = vmatpush.msra.mxu0 %v277
  %774 = vmatpush.msra.mxu0 %v274
  %775 = vmatpush.msra.mxu0 %v271
  %776 = vmatpush.msra.mxu0 %v268
  %777 = vmatpush.msra.mxu0 %v265
  %778 = vmatpush.msra.mxu0 %v262
  %779 = vmatpush.msra.mxu0 %v259
  %780 = vmatpush.msra.mxu0 %v256
  %781 = vmatpush.msra.mxu0 %v253
  %782 = vmatpush.msra.mxu0 %v250
  %783 = vmatpush.msra.mxu0 %v247
  %784 = vmatpush.msra.mxu0 %v244
  %785 = vmatpush.msra.mxu0 %v241
  %786 = vmatpush.msra.mxu0 %v238
  %787 = vmatmul.f32.gmra.mxu0 %v744
  %v788 = vpop.f32.mrf.mxu0
  %v789 = vadd.f32 0.0, %v788
  %790 = vdwg.mxu0
  %791 = vmatpush.msra.mxu0 %v284
  %792 = vmatpush.msra.mxu0 %v281
  %793 = vmatpush.msra.mxu0 %v278
  %794 = vmatpush.msra.mxu0 %v275
  %795 = vmatpush.msra.mxu0 %v272
  %796 = vmatpush.msra.mxu0 %v269
  %797 = vmatpush.msra.mxu0 %v266
  %798 = vmatpush.msra.mxu0 %v263
  %799 = vmatpush.msra.mxu0 %v260
  %800 = vmatpush.msra.mxu0 %v257
  %801 = vmatpush.msra.mxu0 %v254
  %802 = vmatpush.msra.mxu0 %v251
  %803 = vmatpush.msra.mxu0 %v248
  %804 = vmatpush.msra.mxu0 %v245
  %805 = vmatpush.msra.mxu0 %v242
  %806 = vmatpush.msra.mxu0 %v239
  %807 = vmatmul.f32.gmra.mxu0 %v744
  %v808 = vpop.f32.mrf.mxu0
  %v809 = vadd.f32 0.0, %v808
  %810 = vdwg.mxu0
  %v811 = vadd.f32 %v748, %v769
  %v812 = vxor.u32 %v811, 2147483648
  %v813 = vmul.f32 %v812, 1.442695
  %v814 = vpow.pop %v813
  %v815 = vadd.f32 %v814, 1.0
  %v816 = vrcp.pop %v815
  %v817 = vmul.f32 %v815, %v816
  %v818 = vsub.f32 1.0, %v817
  %v819 = vmul.f32 %v816, %v818
  %v820 = vadd.f32 %v816, %v819
  %vm821 = vweird.f32 %v815
  %vm822 = vweird.f32 %v816
  %vm823 = vmor %vm821, %vm822
  %v824 = vsel %vm823, %v816, %v820
  %v825 = vand.u32 2147483647, %v815
  %vm826 = vcmp.eq.f32.partialorder %v825, 8.507059e+37
  %v827 = vand.u32 %v815, 2147483648
  %v828 = vor.u32 1.1754944e-38, %v827
  %v829 = vsel %vm826, %v828, %v824
  %v830 = vmul.f32 1.0, %v829
  %v831 = vadd.f32 %v809, %v287
  %v832 = vmul.f32 %v830, %v831
  %v833 = vadd.f32 %v750, %v832
  %v834 = vadd.f32 %v749, %v789
  %v835 = vxor.u32 %v834, 2147483648
  %v836 = vmul.f32 %v835, 1.442695
  %v837 = vpow.pop %v836
  %v838 = vadd.f32 %v837, 1.0
  %v839 = vrcp.pop %v838
  %v840 = vmul.f32 %v838, %v839
  %v841 = vsub.f32 1.0, %v840
  %v842 = vmul.f32 %v839, %v841
  %v843 = vadd.f32 %v839, %v842
  %vm844 = vweird.f32 %v838
  %vm845 = vweird.f32 %v839
  %vm846 = vmor %vm844, %vm845
  %v847 = vsel %vm846, %v839, %v843
  %v848 = vand.u32 2147483647, %v838
  %vm849 = vcmp.eq.f32.partialorder %v848, 8.507059e+37
  %v850 = vand.u32 %v838, 2147483648
  %v851 = vor.u32 1.1754944e-38, %v850
  %v852 = vsel %vm849, %v851, %v847
  %v853 = vmul.f32 1.0, %v852
  %v854 = vtanh.pop %v833
  %v855 = vsub.f32 1.0, %v853
  %v856 = vmul.f32 %v855, %v854
  %v857 = vmul.f32 %v853, %v744
  %v858 = vadd.f32 %v856, %v857
  %s859 = smul.u32 5, 3
  %s860 = smul.addr %s859, 8
  %s861 = scalar_lea.vmem [#allocation2], %s860
  %v862 = vld [vmem:[%s861] sm:$0xff]
  %v863 = vld [vmem:[%s861 + $0x8] sm:$0xff]
  %v864 = vld [vmem:[%s861 + $0x10] sm:$0xff]
  %865 = vmatpush.msra.mxu0 %v282
  %866 = vmatpush.msra.mxu0 %v279
  %867 = vmatpush.msra.mxu0 %v276
  %868 = vmatpush.msra.mxu0 %v273
  %869 = vmatpush.msra.mxu0 %v270
  %870 = vmatpush.msra.mxu0 %v267
  %871 = vmatpush.msra.mxu0 %v264
  %872 = vmatpush.msra.mxu0 %v261
  %873 = vmatpush.msra.mxu0 %v258
  %874 = vmatpush.msra.mxu0 %v255
  %875 = vmatpush.msra.mxu0 %v252
  %876 = vmatpush.msra.mxu0 %v249
  %877 = vmatpush.msra.mxu0 %v246
  %878 = vmatpush.msra.mxu0 %v243
  %879 = vmatpush.msra.mxu0 %v240
  %880 = vmatpush.msra.mxu0 %v237
  %881 = vmatmul.f32.gmra.mxu0 %v858
  %v882 = vpop.f32.mrf.mxu0
  %v883 = vadd.f32 0.0, %v882
  %884 = vdwg.mxu0
  %885 = vmatpush.msra.mxu0 %v283
  %886 = vmatpush.msra.mxu0 %v280
  %887 = vmatpush.msra.mxu0 %v277
  %888 = vmatpush.msra.mxu0 %v274
  %889 = vmatpush.msra.mxu0 %v271
  %890 = vmatpush.msra.mxu0 %v268
  %891 = vmatpush.msra.mxu0 %v265
  %892 = vmatpush.msra.mxu0 %v262
  %893 = vmatpush.msra.mxu0 %v259
  %894 = vmatpush.msra.mxu0 %v256
  %895 = vmatpush.msra.mxu0 %v253
  %896 = vmatpush.msra.mxu0 %v250
  %897 = vmatpush.msra.mxu0 %v247
  %898 = vmatpush.msra.mxu0 %v244
  %899 = vmatpush.msra.mxu0 %v241
  %900 = vmatpush.msra.mxu0 %v238
  %901 = vmatmul.f32.gmra.mxu0 %v858
  %v902 = vpop.f32.mrf.mxu0
  %v903 = vadd.f32 0.0, %v902
  %904 = vdwg.mxu0
  %905 = vmatpush.msra.mxu0 %v284
  %906 = vmatpush.msra.mxu0 %v281
  %907 = vmatpush.msra.mxu0 %v278
  %908 = vmatpush.msra.mxu0 %v275
  %909 = vmatpush.msra.mxu0 %v272
  %910 = vmatpush.msra.mxu0 %v269
  %911 = vmatpush.msra.mxu0 %v266
  %912 = vmatpush.msra.mxu0 %v263
  %913 = vmatpush.msra.mxu0 %v260
  %914 = vmatpush.msra.mxu0 %v257
  %915 = vmatpush.msra.mxu0 %v254
  %916 = vmatpush.msra.mxu0 %v251
  %917 = vmatpush.msra.mxu0 %v248
  %918 = vmatpush.msra.mxu0 %v245
  %919 = vmatpush.msra.mxu0 %v242
  %920 = vmatpush.msra.mxu0 %v239
  %921 = vmatmul.f32.gmra.mxu0 %v858
  %v922 = vpop.f32.mrf.mxu0
  %v923 = vadd.f32 0.0, %v922
  %924 = vdwg.mxu0
  %v925 = vadd.f32 %v862, %v883
  %v926 = vxor.u32 %v925, 2147483648
  %v927 = vmul.f32 %v926, 1.442695
  %v928 = vpow.pop %v927
  %v929 = vadd.f32 %v928, 1.0
  %v930 = vrcp.pop %v929
  %v931 = vmul.f32 %v929, %v930
  %v932 = vsub.f32 1.0, %v931
  %v933 = vmul.f32 %v930, %v932
  %v934 = vadd.f32 %v930, %v933
  %vm935 = vweird.f32 %v929
  %vm936 = vweird.f32 %v930
  %vm937 = vmor %vm935, %vm936
  %v938 = vsel %vm937, %v930, %v934
  %v939 = vand.u32 2147483647, %v929
  %vm940 = vcmp.eq.f32.partialorder %v939, 8.507059e+37
  %v941 = vand.u32 %v929, 2147483648
  %v942 = vor.u32 1.1754944e-38, %v941
  %v943 = vsel %vm940, %v942, %v938
  %v944 = vmul.f32 1.0, %v943
  %v945 = vadd.f32 %v923, %v287
  %v946 = vmul.f32 %v944, %v945
  %v947 = vadd.f32 %v864, %v946
  %v948 = vadd.f32 %v863, %v903
  %v949 = vxor.u32 %v948, 2147483648
  %v950 = vmul.f32 %v949, 1.442695
  %v951 = vpow.pop %v950
  %v952 = vadd.f32 %v951, 1.0
  %v953 = vrcp.pop %v952
  %v954 = vmul.f32 %v952, %v953
  %v955 = vsub.f32 1.0, %v954
  %v956 = vmul.f32 %v953, %v955
  %v957 = vadd.f32 %v953, %v956
  %vm958 = vweird.f32 %v952
  %vm959 = vweird.f32 %v953
  %vm960 = vmor %vm958, %vm959
  %v961 = vsel %vm960, %v953, %v957
  %v962 = vand.u32 2147483647, %v952
  %vm963 = vcmp.eq.f32.partialorder %v962, 8.507059e+37
  %v964 = vand.u32 %v952, 2147483648
  %v965 = vor.u32 1.1754944e-38, %v964
  %v966 = vsel %vm963, %v965, %v961
  %v967 = vmul.f32 1.0, %v966
  %v968 = vtanh.pop %v947
  %v969 = vsub.f32 1.0, %v967
  %v970 = vmul.f32 %v969, %v968
  %v971 = vmul.f32 %v967, %v858
  %v972 = vadd.f32 %v970, %v971
  %s973 = smul.u32 6, 3
  %s974 = smul.addr %s973, 8
  %s975 = scalar_lea.vmem [#allocation2], %s974
  %v976 = vld [vmem:[%s975] sm:$0xff]
  %v977 = vld [vmem:[%s975 + $0x8] sm:$0xff]
  %v978 = vld [vmem:[%s975 + $0x10] sm:$0xff]
  %979 = vmatpush.msra.mxu0 %v282
  %980 = vmatpush.msra.mxu0 %v279
  %981 = vmatpush.msra.mxu0 %v276
  %982 = vmatpush.msra.mxu0 %v273
  %983 = vmatpush.msra.mxu0 %v270
  %984 = vmatpush.msra.mxu0 %v267
  %985 = vmatpush.msra.mxu0 %v264
  %986 = vmatpush.msra.mxu0 %v261
  %987 = vmatpush.msra.mxu0 %v258
  %988 = vmatpush.msra.mxu0 %v255
  %989 = vmatpush.msra.mxu0 %v252
  %990 = vmatpush.msra.mxu0 %v249
  %991 = vmatpush.msra.mxu0 %v246
  %992 = vmatpush.msra.mxu0 %v243
  %993 = vmatpush.msra.mxu0 %v240
  %994 = vmatpush.msra.mxu0 %v237
  %995 = vmatmul.f32.gmra.mxu0 %v972
  %v996 = vpop.f32.mrf.mxu0
  %v997 = vadd.f32 0.0, %v996
  %998 = vdwg.mxu0
  %999 = vmatpush.msra.mxu0 %v283
  %1000 = vmatpush.msra.mxu0 %v280
  %1001 = vmatpush.msra.mxu0 %v277
  %1002 = vmatpush.msra.mxu0 %v274
  %1003 = vmatpush.msra.mxu0 %v271
  %1004 = vmatpush.msra.mxu0 %v268
  %1005 = vmatpush.msra.mxu0 %v265
  %1006 = vmatpush.msra.mxu0 %v262
  %1007 = vmatpush.msra.mxu0 %v259
  %1008 = vmatpush.msra.mxu0 %v256
  %1009 = vmatpush.msra.mxu0 %v253
  %1010 = vmatpush.msra.mxu0 %v250
  %1011 = vmatpush.msra.mxu0 %v247
  %1012 = vmatpush.msra.mxu0 %v244
  %1013 = vmatpush.msra.mxu0 %v241
  %1014 = vmatpush.msra.mxu0 %v238
  %1015 = vmatmul.f32.gmra.mxu0 %v972
  %v1016 = vpop.f32.mrf.mxu0
  %v1017 = vadd.f32 0.0, %v1016
  %1018 = vdwg.mxu0
  %1019 = vmatpush.msra.mxu0 %v284
  %1020 = vmatpush.msra.mxu0 %v281
  %1021 = vmatpush.msra.mxu0 %v278
  %1022 = vmatpush.msra.mxu0 %v275
  %1023 = vmatpush.msra.mxu0 %v272
  %1024 = vmatpush.msra.mxu0 %v269
  %1025 = vmatpush.msra.mxu0 %v266
  %1026 = vmatpush.msra.mxu0 %v263
  %1027 = vmatpush.msra.mxu0 %v260
  %1028 = vmatpush.msra.mxu0 %v257
  %1029 = vmatpush.msra.mxu0 %v254
  %1030 = vmatpush.msra.mxu0 %v251
  %1031 = vmatpush.msra.mxu0 %v248
  %1032 = vmatpush.msra.mxu0 %v245
  %1033 = vmatpush.msra.mxu0 %v242
  %1034 = vmatpush.msra.mxu0 %v239
  %1035 = vmatmul.f32.gmra.mxu0 %v972
  %v1036 = vpop.f32.mrf.mxu0
  %v1037 = vadd.f32 0.0, %v1036
  %1038 = vdwg.mxu0
  %v1039 = vadd.f32 %v976, %v997
  %v1040 = vxor.u32 %v1039, 2147483648
  %v1041 = vmul.f32 %v1040, 1.442695
  %v1042 = vpow.pop %v1041
  %v1043 = vadd.f32 %v1042, 1.0
  %v1044 = vrcp.pop %v1043
  %v1045 = vmul.f32 %v1043, %v1044
  %v1046 = vsub.f32 1.0, %v1045
  %v1047 = vmul.f32 %v1044, %v1046
  %v1048 = vadd.f32 %v1044, %v1047
  %vm1049 = vweird.f32 %v1043
  %vm1050 = vweird.f32 %v1044
  %vm1051 = vmor %vm1049, %vm1050
  %v1052 = vsel %vm1051, %v1044, %v1048
  %v1053 = vand.u32 2147483647, %v1043
  %vm1054 = vcmp.eq.f32.partialorder %v1053, 8.507059e+37
  %v1055 = vand.u32 %v1043, 2147483648
  %v1056 = vor.u32 1.1754944e-38, %v1055
  %v1057 = vsel %vm1054, %v1056, %v1052
  %v1058 = vmul.f32 1.0, %v1057
  %v1059 = vadd.f32 %v1037, %v287
  %v1060 = vmul.f32 %v1058, %v1059
  %v1061 = vadd.f32 %v978, %v1060
  %v1062 = vadd.f32 %v977, %v1017
  %v1063 = vxor.u32 %v1062, 2147483648
  %v1064 = vmul.f32 %v1063, 1.442695
  %v1065 = vpow.pop %v1064
  %v1066 = vadd.f32 %v1065, 1.0
  %v1067 = vrcp.pop %v1066
  %v1068 = vmul.f32 %v1066, %v1067
  %v1069 = vsub.f32 1.0, %v1068
  %v1070 = vmul.f32 %v1067, %v1069
  %v1071 = vadd.f32 %v1067, %v1070
  %vm1072 = vweird.f32 %v1066
  %vm1073 = vweird.f32 %v1067
  %vm1074 = vmor %vm1072, %vm1073
  %v1075 = vsel %vm1074, %v1067, %v1071
  %v1076 = vand.u32 2147483647, %v1066
  %vm1077 = vcmp.eq.f32.partialorder %v1076, 8.507059e+37
  %v1078 = vand.u32 %v1066, 2147483648
  %v1079 = vor.u32 1.1754944e-38, %v1078
  %v1080 = vsel %vm1077, %v1079, %v1075
  %v1081 = vmul.f32 1.0, %v1080
  %v1082 = vtanh.pop %v1061
  %v1083 = vsub.f32 1.0, %v1081
  %v1084 = vmul.f32 %v1083, %v1082
  %v1085 = vmul.f32 %v1081, %v972
  %v1086 = vadd.f32 %v1084, %v1085
  %s1087 = smul.u32 7, 3
  %s1088 = smul.addr %s1087, 8
  %s1089 = scalar_lea.vmem [#allocation2], %s1088
  %v1090 = vld [vmem:[%s1089] sm:$0xff]
  %v1091 = vld [vmem:[%s1089 + $0x8] sm:$0xff]
  %v1092 = vld [vmem:[%s1089 + $0x10] sm:$0xff]
  %1093 = vmatpush.msra.mxu0 %v282
  %1094 = vmatpush.msra.mxu0 %v279
  %1095 = vmatpush.msra.mxu0 %v276
  %1096 = vmatpush.msra.mxu0 %v273
  %1097 = vmatpush.msra.mxu0 %v270
  %1098 = vmatpush.msra.mxu0 %v267
  %1099 = vmatpush.msra.mxu0 %v264
  %1100 = vmatpush.msra.mxu0 %v261
  %1101 = vmatpush.msra.mxu0 %v258
  %1102 = vmatpush.msra.mxu0 %v255
  %1103 = vmatpush.msra.mxu0 %v252
  %1104 = vmatpush.msra.mxu0 %v249
  %1105 = vmatpush.msra.mxu0 %v246
  %1106 = vmatpush.msra.mxu0 %v243
  %1107 = vmatpush.msra.mxu0 %v240
  %1108 = vmatpush.msra.mxu0 %v237
  %1109 = vmatmul.f32.gmra.mxu0 %v1086
  %v1110 = vpop.f32.mrf.mxu0
  %v1111 = vadd.f32 0.0, %v1110
  %1112 = vdwg.mxu0
  %1113 = vmatpush.msra.mxu0 %v283
  %1114 = vmatpush.msra.mxu0 %v280
  %1115 = vmatpush.msra.mxu0 %v277
  %1116 = vmatpush.msra.mxu0 %v274
  %1117 = vmatpush.msra.mxu0 %v271
  %1118 = vmatpush.msra.mxu0 %v268
  %1119 = vmatpush.msra.mxu0 %v265
  %1120 = vmatpush.msra.mxu0 %v262
  %1121 = vmatpush.msra.mxu0 %v259
  %1122 = vmatpush.msra.mxu0 %v256
  %1123 = vmatpush.msra.mxu0 %v253
  %1124 = vmatpush.msra.mxu0 %v250
  %1125 = vmatpush.msra.mxu0 %v247
  %1126 = vmatpush.msra.mxu0 %v244
  %1127 = vmatpush.msra.mxu0 %v241
  %1128 = vmatpush.msra.mxu0 %v238
  %1129 = vmatmul.f32.gmra.mxu0 %v1086
  %v1130 = vpop.f32.mrf.mxu0
  %v1131 = vadd.f32 0.0, %v1130
  %1132 = vdwg.mxu0
  %1133 = vmatpush.msra.mxu0 %v284
  %1134 = vmatpush.msra.mxu0 %v281
  %1135 = vmatpush.msra.mxu0 %v278
  %1136 = vmatpush.msra.mxu0 %v275
  %1137 = vmatpush.msra.mxu0 %v272
  %1138 = vmatpush.msra.mxu0 %v269
  %1139 = vmatpush.msra.mxu0 %v266
  %1140 = vmatpush.msra.mxu0 %v263
  %1141 = vmatpush.msra.mxu0 %v260
  %1142 = vmatpush.msra.mxu0 %v257
  %1143 = vmatpush.msra.mxu0 %v254
  %1144 = vmatpush.msra.mxu0 %v251
  %1145 = vmatpush.msra.mxu0 %v248
  %1146 = vmatpush.msra.mxu0 %v245
  %1147 = vmatpush.msra.mxu0 %v242
  %1148 = vmatpush.msra.mxu0 %v239
  %1149 = vmatmul.f32.gmra.mxu0 %v1086
  %v1150 = vpop.f32.mrf.mxu0
  %v1151 = vadd.f32 0.0, %v1150
  %1152 = vdwg.mxu0
  %v1153 = vadd.f32 %v1090, %v1111
  %v1154 = vxor.u32 %v1153, 2147483648
  %v1155 = vmul.f32 %v1154, 1.442695
  %v1156 = vpow.pop %v1155
  %v1157 = vadd.f32 %v1156, 1.0
  %v1158 = vrcp.pop %v1157
  %v1159 = vmul.f32 %v1157, %v1158
  %v1160 = vsub.f32 1.0, %v1159
  %v1161 = vmul.f32 %v1158, %v1160
  %v1162 = vadd.f32 %v1158, %v1161
  %vm1163 = vweird.f32 %v1157
  %vm1164 = vweird.f32 %v1158
  %vm1165 = vmor %vm1163, %vm1164
  %v1166 = vsel %vm1165, %v1158, %v1162
  %v1167 = vand.u32 2147483647, %v1157
  %vm1168 = vcmp.eq.f32.partialorder %v1167, 8.507059e+37
  %v1169 = vand.u32 %v1157, 2147483648
  %v1170 = vor.u32 1.1754944e-38, %v1169
  %v1171 = vsel %vm1168, %v1170, %v1166
  %v1172 = vmul.f32 1.0, %v1171
  %v1173 = vadd.f32 %v1151, %v287
  %v1174 = vmul.f32 %v1172, %v1173
  %v1175 = vadd.f32 %v1092, %v1174
  %v1176 = vadd.f32 %v1091, %v1131
  %v1177 = vxor.u32 %v1176, 2147483648
  %v1178 = vmul.f32 %v1177, 1.442695
  %v1179 = vpow.pop %v1178
  %v1180 = vadd.f32 %v1179, 1.0
  %v1181 = vrcp.pop %v1180
  %v1182 = vmul.f32 %v1180, %v1181
  %v1183 = vsub.f32 1.0, %v1182
  %v1184 = vmul.f32 %v1181, %v1183
  %v1185 = vadd.f32 %v1181, %v1184
  %vm1186 = vweird.f32 %v1180
  %vm1187 = vweird.f32 %v1181
  %vm1188 = vmor %vm1186, %vm1187
  %v1189 = vsel %vm1188, %v1181, %v1185
  %v1190 = vand.u32 2147483647, %v1180
  %vm1191 = vcmp.eq.f32.partialorder %v1190, 8.507059e+37
  %v1192 = vand.u32 %v1180, 2147483648
  %v1193 = vor.u32 1.1754944e-38, %v1192
  %v1194 = vsel %vm1191, %v1193, %v1189
  %v1195 = vmul.f32 1.0, %v1194
  %v1196 = vtanh.pop %v1175
  %v1197 = vsub.f32 1.0, %v1195
  %v1198 = vmul.f32 %v1197, %v1196
  %v1199 = vmul.f32 %v1195, %v1086
  %v1200 = vadd.f32 %v1198, %v1199
  %v1201 = vld [vmem:[%s5] sm:$0xff]
  %v1202 = vld [vmem:[%s5 + $0x8] sm:$0xff]
  %v1203 = vld [vmem:[%s5 + $0x10] sm:$0xff]
  %v1204 = vld [vmem:[%s5 + $0x18] sm:$0xff]
  %v1205 = vld [vmem:[%s5 + $0x20] sm:$0xff]
  %v1206 = vld [vmem:[%s5 + $0x28] sm:$0xff]
  %v1207 = vld [vmem:[%s5 + $0x30] sm:$0xff]
  %v1208 = vld [vmem:[%s5 + $0x38] sm:$0xff]
  %v1209 = vld [vmem:[%s5 + $0x40] sm:$0xff]
  %v1210 = vld [vmem:[%s5 + $0x48] sm:$0xff]
  %v1211 = vld [vmem:[%s5 + $0x50] sm:$0xff]
  %v1212 = vld [vmem:[%s5 + $0x58] sm:$0xff]
  %v1213 = vld [vmem:[%s5 + $0x60] sm:$0xff]
  %v1214 = vld [vmem:[%s5 + $0x68] sm:$0xff]
  %v1215 = vld [vmem:[%s5 + $0x70] sm:$0xff]
  %v1216 = vld [vmem:[%s5 + $0x78] sm:$0xff]
  %v1217 = vld [vmem:[%s6] sm:$0x1]
  %v1219 = vperm.slane %v1217, 0
  %1221 = vmatpush.msra.mxu0 %v1216
  %1222 = vmatpush.msra.mxu0 %v1215
  %1223 = vmatpush.msra.mxu0 %v1214
  %1224 = vmatpush.msra.mxu0 %v1213
  %1225 = vmatpush.msra.mxu0 %v1212
  %1226 = vmatpush.msra.mxu0 %v1211
  %1227 = vmatpush.msra.mxu0 %v1210
  %1228 = vmatpush.msra.mxu0 %v1209
  %1229 = vmatpush.msra.mxu0 %v1208
  %1230 = vmatpush.msra.mxu0 %v1207
  %1231 = vmatpush.msra.mxu0 %v1206
  %1232 = vmatpush.msra.mxu0 %v1205
  %1233 = vmatpush.msra.mxu0 %v1204
  %1234 = vmatpush.msra.mxu0 %v1203
  %1235 = vmatpush.msra.mxu0 %v1202
  %1236 = vmatpush.msra.mxu0 %v1201
  %1237 = vmatmul.f32.gmra.mxu0 %v1200
  %v1238 = vpop.f32.mrf.mxu0
  %v1239 = vadd.f32 %v1219, %v1238
  %1240 = vdwg.mxu0
  %1241 = vst [vmem:[%s7] sm:$0xff] %v1239
  // Predicated region
  $region30: #{gru_forward.1} parent=0 // pred_check
    _
  $region31: #{gru_forward.1} parent=0 // pred_check_branch
    %1243 = sbr.rel (0) target = $region33
  $region32: #{gru_forward.1} parent=0 // pred_region
    _
  $region33: #{gru_forward.1} parent=0 // pred_fallthru
    _
  // Predicated region
  $region34: #{gru_forward.1} parent=0 // pred_check
    _
  $region35: #{gru_forward.1} parent=0 // pred_check_branch
    %1245 = sbr.rel (0) target = $region37
  $region36: #{gru_forward.1} parent=0 // pred_region
    _
  $region37: #{gru_forward.1} parent=0 // pred_fallthru
    _

</llo_original>
